<compile_context>
chip_gen: v5e
topology: v5e:2x2
jax: 0.10.0
libtpu: 0.0.40
codegen_flags: <defaults>
</compile_context>

<pallas_src>
import jax
import jax.numpy as jnp
from jax import lax
from jax.experimental import pallas as pl
from jax.experimental.pallas import tpu as pltpu


def _round_up8(n):
    return ((n + 7) // 8) * 8


def autoencoder_kernel(x_ref, enc_ref, dec_ref, out_ref):
    # x_ref : (S, Bb, F)  time-major batch block
    # enc_ref: (F+E+1, 4E) packed [ewi | ewh | eb]        (row offsets 8-aligned)
    # dec_ref: (.., 4H)   packed [dwi | dwh | db | lin]   (row offsets 8-aligned)
    # out_ref: (Bb, S)
    S, Bb, F = x_ref.shape
    E = enc_ref.shape[1] // 4          # encoder hidden size (= embedding_dim)
    H = dec_ref.shape[1] // 4          # decoder hidden size (= 2*embedding_dim)

    def lstm_cell(x_gates, h, c, whh, hid):
        # recurrent part only: h @ W_hh^T + (precomputed input projection)
        gates = x_gates + jnp.dot(h, whh, preferred_element_type=jnp.float32)
        # Gate order (i,f,g,o).  Narrow lane slices kept for clarity/robustness;
        # they are cheap relative to the batched recurrent matmul.
        i = jax.nn.sigmoid(gates[:, 0 * hid:1 * hid])
        f = jax.nn.sigmoid(gates[:, 1 * hid:2 * hid])
        g = jnp.tanh(gates[:, 2 * hid:3 * hid])
        o = jax.nn.sigmoid(gates[:, 3 * hid:4 * hid])
        c_new = f * c + i * g
        h_new = o * jnp.tanh(c_new)
        return h_new, c_new

    # ---- Encoder LSTM over the sequence; keep the final hidden state ----
    ewi = enc_ref[0:F, :]                       # (F, 4E)
    ewh = enc_ref[F:F + E, :]                   # (E, 4E)
    eb = enc_ref[F + E:F + E + 1, :]            # (1, 4E)

    # Input projection for ALL (time, batch) pairs hoisted out of the loop.
    x2 = x_ref[...].reshape(S * Bb, F)          # time-major rows: t*Bb + j
    xg_all = jnp.dot(x2, ewi, preferred_element_type=jnp.float32) + eb  # (S*Bb,4E)

    h = jnp.zeros((Bb, E), jnp.float32)
    c = jnp.zeros((Bb, E), jnp.float32)
    for t in range(S):                          # static, fully unrolled
        xg_t = xg_all[t * Bb:(t + 1) * Bb, :]   # static slice -> (Bb, 4E)
        h, c = lstm_cell(xg_t, h, c, ewh, E)
    h_enc = h                                   # (Bb, E) latent

    # ---- Decoder LSTM: latent repeated seq_len times as input ----
    dwi = dec_ref[0:E, :]                       # (E, 4H)
    dwh = dec_ref[E:E + H, :]                   # (H, 4H)
    db = dec_ref[E + H:E + H + 1, :]            # (1, 4H)
    lin_row = _round_up8(E + H + 1)
    lin = dec_ref[lin_row:lin_row + 1, :]       # (1, 4H): [lw(0:H) | lb(H)]
    lw = lin[:, 0:H]                            # (1, H)
    lb = lin[:, H:H + 1]                        # (1, 1)

    # loop-invariant input projection (same latent at every timestep)
    dxg = jnp.dot(h_enc, dwi, preferred_element_type=jnp.float32) + db  # (Bb,4H)

    hd = jnp.zeros((Bb, H), jnp.float32)
    cd = jnp.zeros((Bb, H), jnp.float32)
    cols = []
    for t in range(S):                          # static, fully unrolled
        hd, cd = lstm_cell(dxg, hd, cd, dwh, H)
        # Linear(H,1) as VPU multiply + lane reduction (off the critical path)
        cols.append(jnp.sum(hd * lw, axis=-1, keepdims=True))          # (Bb,1)

    out_ref[...] = jnp.concatenate(cols, axis=1) + lb                   # (Bb,S)


def autoencoder_forward(x, params):
    """x: (B, S, F) batch of sequences.  Returns (B, S): row b is the
    reconstructed sequence for sample b (the module's (1, seq_len) output)."""
    enc_slab, dec_slab = params
    B, S, F = x.shape
    # Batch block: 8 rows fill MXU sublanes and satisfy the (8,128) tiling rule.
    Bb = 8 if B % 8 == 0 else B
    x_tm = jnp.transpose(x, (1, 0, 2))          # time-major (S, B, F), done by XLA

    out = pl.pallas_call(
        autoencoder_kernel,
        out_shape=jax.ShapeDtypeStruct((B, S), jnp.float32),
        grid=(B // Bb,),
        in_specs=[
            pl.BlockSpec((S, Bb, F), lambda b: (0, b, 0)),
            pl.BlockSpec(enc_slab.shape, lambda b: (0, 0)),   # whole slab, VMEM-resident
            pl.BlockSpec(dec_slab.shape, lambda b: (0, 0)),
        ],
        out_specs=pl.BlockSpec((Bb, S), lambda b: (b, 0)),
        compiler_params=pltpu.CompilerParams(
            dimension_semantics=("parallel",)),   # batch blocks split over TCs (v7x)
    )(x_tm, enc_slab, dec_slab)
    return out


def init_raw_params(key, n_features, embedding_dim):
    """Deterministic PyTorch-style init: U(-1/sqrt(hidden), 1/sqrt(hidden))."""
    E = embedding_dim
    H = 2 * E
    keys = jax.random.split(key, 10)

    def u(k, shape, fan):
        bound = 1.0 / (fan ** 0.5)
        return jax.random.uniform(k, shape, jnp.float32, -bound, bound)

    # Encoder LSTM: input_size=n_features, hidden_size=E
    e_wih = u(keys[0], (4 * E, n_features), E)
    e_whh = u(keys[1], (4 * E, E), E)
    e_b = u(keys[2], (4 * E,), E) + u(keys[3], (4 * E,), E)   # b_ih + b_hh
    # Decoder LSTM: input_size=E, hidden_size=H=2E
    d_wih = u(keys[4], (4 * H, E), H)
    d_whh = u(keys[5], (4 * H, H), H)
    d_b = u(keys[6], (4 * H,), H) + u(keys[7], (4 * H,), H)
    # Dense layer: Linear(H, 1)
    l_w = u(keys[8], (1, H), H)
    l_b = u(keys[9], (1,), H)
    return (e_wih, e_whh, e_b, d_wih, d_whh, d_b, l_w, l_b)


def pack_params(raw):
    """Pack the 9 small parameter arrays into 2 lane-padded VMEM slabs with
    8-aligned row offsets (pre-transposed so the kernel does plain matmuls)."""
    e_wih, e_whh, e_b, d_wih, d_whh, d_b, l_w, l_b = raw
    F = e_wih.shape[1]
    E = e_whh.shape[1]
    H = d_whh.shape[1]

    enc_slab = jnp.zeros((F + E + 1, 4 * E), jnp.float32)
    enc_slab = enc_slab.at[0:F].set(e_wih.T)
    enc_slab = enc_slab.at[F:F + E].set(e_whh.T)
    enc_slab = enc_slab.at[F + E].set(e_b)

    lin_row = _round_up8(E + H + 1)
    dec_slab = jnp.zeros((lin_row + 1, 4 * H), jnp.float32)
    dec_slab = dec_slab.at[0:E].set(d_wih.T)
    dec_slab = dec_slab.at[E:E + H].set(d_whh.T)
    dec_slab = dec_slab.at[E + H].set(d_b)
    dec_slab = dec_slab.at[lin_row, 0:H].set(l_w[0])
    dec_slab = dec_slab.at[lin_row, H].set(l_b[0])
    return enc_slab, dec_slab


def reference_forward(x, raw):
    """Pure-JAX reference of the reconstructed forward pass (batched)."""
    e_wih, e_whh, e_b, d_wih, d_whh, d_b, l_w, l_b = raw
    B, S, _ = x.shape
    E = e_whh.shape[1]
    H = d_whh.shape[1]
    hi = jax.lax.Precision.HIGHEST

    def cell(xt, h, c, wih, whh, b, hid):
        g = (jnp.dot(xt, wih.T, precision=hi)
             + jnp.dot(h, whh.T, precision=hi) + b)
        i = jax.nn.sigmoid(g[:, 0 * hid:1 * hid])
        f = jax.nn.sigmoid(g[:, 1 * hid:2 * hid])
        gg = jnp.tanh(g[:, 2 * hid:3 * hid])
        o = jax.nn.sigmoid(g[:, 3 * hid:4 * hid])
        c2 = f * c + i * gg
        return o * jnp.tanh(c2), c2

    h = jnp.zeros((B, E), jnp.float32)
    c = jnp.zeros((B, E), jnp.float32)
    for t in range(S):
        h, c = cell(x[:, t, :], h, c, e_wih, e_whh, e_b, E)
    hd = jnp.zeros((B, H), jnp.float32)
    cd = jnp.zeros((B, H), jnp.float32)
    outs = []
    for _ in range(S):
        hd, cd = cell(h, hd, cd, d_wih, d_whh, d_b, H)
        outs.append(jnp.dot(hd, l_w.T, precision=hi) + l_b)  # (B,1)
    return jnp.concatenate(outs, axis=1)                      # (B,S)


if __name__ == "__main__":
    seq_len = 8
    n_features = 8         # encoder n_features (== seq_len in the module default)
    embedding_dim = 32     # latent dim; decoder hidden = 64
    batch = 16             # fills MXU rows; grid=(2,) -> megacore split on v7x

    key = jax.random.PRNGKey(0)
    kx, kp = jax.random.split(key)
    x = jax.random.normal(kx, (batch, seq_len, n_features), jnp.float32)
    raw = init_raw_params(kp, n_features, embedding_dim)
    params = pack_params(raw)

    r = autoencoder_forward(x, params)
    jax.block_until_ready(r)
    assert r.shape == (batch, seq_len) and r.dtype == jnp.float32

    ref = reference_forward(x, raw)
    max_err = float(jnp.max(jnp.abs(r - ref)))
    assert max_err < 2e-3, f"max abs err {max_err}"
    print("KERNEL_OK")
</pallas_src>

<mosaic_0001>
module attributes {stable_mosaic.version = 11 : i64} {
  func.func @autoencoder_kernel(%arg0: i32, %arg1: memref<8x8x8xf32, #tpu.memory_space<vmem>>, %arg2: memref<41x128xf32, #tpu.memory_space<vmem>>, %arg3: memref<105x256xf32, #tpu.memory_space<vmem>>, %arg4: memref<8x8xf32, #tpu.memory_space<vmem>>) attributes {dimension_semantics = [#tpu.dimension_semantics<parallel>], iteration_bounds = array<i64: 2>, scalar_prefetch = 0 : i64, scratch_operands = 0 : i64, tpu.core_type = #tpu.core_type<tc>, window_params = [{transform_indices = @transform_0, window_bounds = array<i64: 8, 8, 8>}, {pipeline_mode = #tpu.pipeline_mode<synchronous>, transform_indices = @transform_1, window_bounds = array<i64: 41, 128>}, {pipeline_mode = #tpu.pipeline_mode<synchronous>, transform_indices = @transform_2, window_bounds = array<i64: 105, 256>}, {transform_indices = @transform_3, window_bounds = array<i64: 8, 8>}]} {
    %c0 = arith.constant 0 : index
    %c0_0 = arith.constant 0 : index
    %0 = vector.load %arg2[%c0, %c0_0] : memref<41x128xf32, #tpu.memory_space<vmem>>, vector<8x128xf32>
    %c8 = arith.constant 8 : index
    %c0_1 = arith.constant 0 : index
    %1 = vector.load %arg2[%c8, %c0_1] : memref<41x128xf32, #tpu.memory_space<vmem>>, vector<32x128xf32>
    %c40 = arith.constant 40 : index
    %c0_2 = arith.constant 0 : index
    %2 = vector.load %arg2[%c40, %c0_2] : memref<41x128xf32, #tpu.memory_space<vmem>>, vector<1x128xf32>
    %c0_3 = arith.constant 0 : index
    %c0_4 = arith.constant 0 : index
    %c0_5 = arith.constant 0 : index
    %3 = vector.load %arg1[%c0_3, %c0_4, %c0_5] : memref<8x8x8xf32, #tpu.memory_space<vmem>>, vector<8x8x8xf32>
    %4 = vector.shape_cast %3 : vector<8x8x8xf32> to vector<64x8xf32>
    %cst = arith.constant dense<0.000000e+00> : vector<64x128xf32>
    %5 = tpu.matmul %4, %0, %cst {dimension_numbers = #tpu.dot_dimension_numbers<[1], [0], [0], [1], [0, 0, 1, 1], [], []>} : vector<64x8xf32>, vector<8x128xf32>, vector<64x128xf32> -> vector<64x128xf32>
    %6 = vector.broadcast %2 : vector<1x128xf32> to vector<64x128xf32>
    %7 = arith.addf %5, %6 : vector<64x128xf32>
    %cst_6 = arith.constant 0.000000e+00 : f32
    %8 = vector.broadcast %cst_6 : f32 to vector<8x32xf32>
    %cst_7 = arith.constant 0.000000e+00 : f32
    %9 = vector.broadcast %cst_7 : f32 to vector<8x32xf32>
    %10 = vector.extract_strided_slice %7 {offsets = [0, 0], sizes = [8, 128], strides = [1, 1]} : vector<64x128xf32> to vector<8x128xf32>
    %cst_8 = arith.constant dense<0.000000e+00> : vector<8x128xf32>
    %11 = tpu.matmul %8, %1, %cst_8 {dimension_numbers = #tpu.dot_dimension_numbers<[1], [0], [0], [1], [0, 0, 1, 1], [], []>} : vector<8x32xf32>, vector<32x128xf32>, vector<8x128xf32> -> vector<8x128xf32>
    %12 = arith.addf %10, %11 : vector<8x128xf32>
    %13 = vector.extract_strided_slice %12 {offsets = [0, 0], sizes = [8, 32], strides = [1, 1]} : vector<8x128xf32> to vector<8x32xf32>
    %14 = arith.negf %13 : vector<8x32xf32>
    %15 = math.exp %14 : vector<8x32xf32>
    %cst_9 = arith.constant 1.000000e+00 : f32
    %16 = vector.broadcast %cst_9 : f32 to vector<8x32xf32>
    %17 = arith.addf %16, %15 : vector<8x32xf32>
    %18 = arith.divf %16, %17 : vector<8x32xf32>
    %19 = vector.extract_strided_slice %12 {offsets = [0, 32], sizes = [8, 32], strides = [1, 1]} : vector<8x128xf32> to vector<8x32xf32>
    %20 = arith.negf %19 : vector<8x32xf32>
    %21 = math.exp %20 : vector<8x32xf32>
    %cst_10 = arith.constant 1.000000e+00 : f32
    %22 = vector.broadcast %cst_10 : f32 to vector<8x32xf32>
    %23 = arith.addf %22, %21 : vector<8x32xf32>
    %24 = arith.divf %22, %23 : vector<8x32xf32>
    %25 = vector.extract_strided_slice %12 {offsets = [0, 64], sizes = [8, 32], strides = [1, 1]} : vector<8x128xf32> to vector<8x32xf32>
    %26 = math.tanh %25 : vector<8x32xf32>
    %27 = vector.extract_strided_slice %12 {offsets = [0, 96], sizes = [8, 32], strides = [1, 1]} : vector<8x128xf32> to vector<8x32xf32>
    %28 = arith.negf %27 : vector<8x32xf32>
    %29 = math.exp %28 : vector<8x32xf32>
    %cst_11 = arith.constant 1.000000e+00 : f32
    %30 = vector.broadcast %cst_11 : f32 to vector<8x32xf32>
    %31 = arith.addf %30, %29 : vector<8x32xf32>
    %32 = arith.divf %30, %31 : vector<8x32xf32>
    %33 = arith.mulf %24, %9 : vector<8x32xf32>
    %34 = arith.mulf %18, %26 : vector<8x32xf32>
    %35 = arith.addf %33, %34 : vector<8x32xf32>
    %36 = math.tanh %35 : vector<8x32xf32>
    %37 = arith.mulf %32, %36 : vector<8x32xf32>
    %38 = vector.extract_strided_slice %7 {offsets = [8, 0], sizes = [8, 128], strides = [1, 1]} : vector<64x128xf32> to vector<8x128xf32>
    %cst_12 = arith.constant dense<0.000000e+00> : vector<8x128xf32>
    %39 = tpu.matmul %37, %1, %cst_12 {dimension_numbers = #tpu.dot_dimension_numbers<[1], [0], [0], [1], [0, 0, 1, 1], [], []>} : vector<8x32xf32>, vector<32x128xf32>, vector<8x128xf32> -> vector<8x128xf32>
    %40 = arith.addf %38, %39 : vector<8x128xf32>
    %41 = vector.extract_strided_slice %40 {offsets = [0, 0], sizes = [8, 32], strides = [1, 1]} : vector<8x128xf32> to vector<8x32xf32>
    %42 = arith.negf %41 : vector<8x32xf32>
    %43 = math.exp %42 : vector<8x32xf32>
    %cst_13 = arith.constant 1.000000e+00 : f32
    %44 = vector.broadcast %cst_13 : f32 to vector<8x32xf32>
    %45 = arith.addf %44, %43 : vector<8x32xf32>
    %46 = arith.divf %44, %45 : vector<8x32xf32>
    %47 = vector.extract_strided_slice %40 {offsets = [0, 32], sizes = [8, 32], strides = [1, 1]} : vector<8x128xf32> to vector<8x32xf32>
    %48 = arith.negf %47 : vector<8x32xf32>
    %49 = math.exp %48 : vector<8x32xf32>
    %cst_14 = arith.constant 1.000000e+00 : f32
    %50 = vector.broadcast %cst_14 : f32 to vector<8x32xf32>
    %51 = arith.addf %50, %49 : vector<8x32xf32>
    %52 = arith.divf %50, %51 : vector<8x32xf32>
    %53 = vector.extract_strided_slice %40 {offsets = [0, 64], sizes = [8, 32], strides = [1, 1]} : vector<8x128xf32> to vector<8x32xf32>
    %54 = math.tanh %53 : vector<8x32xf32>
    %55 = vector.extract_strided_slice %40 {offsets = [0, 96], sizes = [8, 32], strides = [1, 1]} : vector<8x128xf32> to vector<8x32xf32>
    %56 = arith.negf %55 : vector<8x32xf32>
    %57 = math.exp %56 : vector<8x32xf32>
    %cst_15 = arith.constant 1.000000e+00 : f32
    %58 = vector.broadcast %cst_15 : f32 to vector<8x32xf32>
    %59 = arith.addf %58, %57 : vector<8x32xf32>
    %60 = arith.divf %58, %59 : vector<8x32xf32>
    %61 = arith.mulf %52, %35 : vector<8x32xf32>
    %62 = arith.mulf %46, %54 : vector<8x32xf32>
    %63 = arith.addf %61, %62 : vector<8x32xf32>
    %64 = math.tanh %63 : vector<8x32xf32>
    %65 = arith.mulf %60, %64 : vector<8x32xf32>
    %66 = vector.extract_strided_slice %7 {offsets = [16, 0], sizes = [8, 128], strides = [1, 1]} : vector<64x128xf32> to vector<8x128xf32>
    %cst_16 = arith.constant dense<0.000000e+00> : vector<8x128xf32>
    %67 = tpu.matmul %65, %1, %cst_16 {dimension_numbers = #tpu.dot_dimension_numbers<[1], [0], [0], [1], [0, 0, 1, 1], [], []>} : vector<8x32xf32>, vector<32x128xf32>, vector<8x128xf32> -> vector<8x128xf32>
    %68 = arith.addf %66, %67 : vector<8x128xf32>
    %69 = vector.extract_strided_slice %68 {offsets = [0, 0], sizes = [8, 32], strides = [1, 1]} : vector<8x128xf32> to vector<8x32xf32>
    %70 = arith.negf %69 : vector<8x32xf32>
    %71 = math.exp %70 : vector<8x32xf32>
    %cst_17 = arith.constant 1.000000e+00 : f32
    %72 = vector.broadcast %cst_17 : f32 to vector<8x32xf32>
    %73 = arith.addf %72, %71 : vector<8x32xf32>
    %74 = arith.divf %72, %73 : vector<8x32xf32>
    %75 = vector.extract_strided_slice %68 {offsets = [0, 32], sizes = [8, 32], strides = [1, 1]} : vector<8x128xf32> to vector<8x32xf32>
    %76 = arith.negf %75 : vector<8x32xf32>
    %77 = math.exp %76 : vector<8x32xf32>
    %cst_18 = arith.constant 1.000000e+00 : f32
    %78 = vector.broadcast %cst_18 : f32 to vector<8x32xf32>
    %79 = arith.addf %78, %77 : vector<8x32xf32>
    %80 = arith.divf %78, %79 : vector<8x32xf32>
    %81 = vector.extract_strided_slice %68 {offsets = [0, 64], sizes = [8, 32], strides = [1, 1]} : vector<8x128xf32> to vector<8x32xf32>
    %82 = math.tanh %81 : vector<8x32xf32>
    %83 = vector.extract_strided_slice %68 {offsets = [0, 96], sizes = [8, 32], strides = [1, 1]} : vector<8x128xf32> to vector<8x32xf32>
    %84 = arith.negf %83 : vector<8x32xf32>
    %85 = math.exp %84 : vector<8x32xf32>
    %cst_19 = arith.constant 1.000000e+00 : f32
    %86 = vector.broadcast %cst_19 : f32 to vector<8x32xf32>
    %87 = arith.addf %86, %85 : vector<8x32xf32>
    %88 = arith.divf %86, %87 : vector<8x32xf32>
    %89 = arith.mulf %80, %63 : vector<8x32xf32>
    %90 = arith.mulf %74, %82 : vector<8x32xf32>
    %91 = arith.addf %89, %90 : vector<8x32xf32>
    %92 = math.tanh %91 : vector<8x32xf32>
    %93 = arith.mulf %88, %92 : vector<8x32xf32>
    %94 = vector.extract_strided_slice %7 {offsets = [24, 0], sizes = [8, 128], strides = [1, 1]} : vector<64x128xf32> to vector<8x128xf32>
    %cst_20 = arith.constant dense<0.000000e+00> : vector<8x128xf32>
    %95 = tpu.matmul %93, %1, %cst_20 {dimension_numbers = #tpu.dot_dimension_numbers<[1], [0], [0], [1], [0, 0, 1, 1], [], []>} : vector<8x32xf32>, vector<32x128xf32>, vector<8x128xf32> -> vector<8x128xf32>
    %96 = arith.addf %94, %95 : vector<8x128xf32>
    %97 = vector.extract_strided_slice %96 {offsets = [0, 0], sizes = [8, 32], strides = [1, 1]} : vector<8x128xf32> to vector<8x32xf32>
    %98 = arith.negf %97 : vector<8x32xf32>
    %99 = math.exp %98 : vector<8x32xf32>
    %cst_21 = arith.constant 1.000000e+00 : f32
    %100 = vector.broadcast %cst_21 : f32 to vector<8x32xf32>
    %101 = arith.addf %100, %99 : vector<8x32xf32>
    %102 = arith.divf %100, %101 : vector<8x32xf32>
    %103 = vector.extract_strided_slice %96 {offsets = [0, 32], sizes = [8, 32], strides = [1, 1]} : vector<8x128xf32> to vector<8x32xf32>
    %104 = arith.negf %103 : vector<8x32xf32>
    %105 = math.exp %104 : vector<8x32xf32>
    %cst_22 = arith.constant 1.000000e+00 : f32
    %106 = vector.broadcast %cst_22 : f32 to vector<8x32xf32>
    %107 = arith.addf %106, %105 : vector<8x32xf32>
    %108 = arith.divf %106, %107 : vector<8x32xf32>
    %109 = vector.extract_strided_slice %96 {offsets = [0, 64], sizes = [8, 32], strides = [1, 1]} : vector<8x128xf32> to vector<8x32xf32>
    %110 = math.tanh %109 : vector<8x32xf32>
    %111 = vector.extract_strided_slice %96 {offsets = [0, 96], sizes = [8, 32], strides = [1, 1]} : vector<8x128xf32> to vector<8x32xf32>
    %112 = arith.negf %111 : vector<8x32xf32>
    %113 = math.exp %112 : vector<8x32xf32>
    %cst_23 = arith.constant 1.000000e+00 : f32
    %114 = vector.broadcast %cst_23 : f32 to vector<8x32xf32>
    %115 = arith.addf %114, %113 : vector<8x32xf32>
    %116 = arith.divf %114, %115 : vector<8x32xf32>
    %117 = arith.mulf %108, %91 : vector<8x32xf32>
    %118 = arith.mulf %102, %110 : vector<8x32xf32>
    %119 = arith.addf %117, %118 : vector<8x32xf32>
    %120 = math.tanh %119 : vector<8x32xf32>
    %121 = arith.mulf %116, %120 : vector<8x32xf32>
    %122 = vector.extract_strided_slice %7 {offsets = [32, 0], sizes = [8, 128], strides = [1, 1]} : vector<64x128xf32> to vector<8x128xf32>
    %cst_24 = arith.constant dense<0.000000e+00> : vector<8x128xf32>
    %123 = tpu.matmul %121, %1, %cst_24 {dimension_numbers = #tpu.dot_dimension_numbers<[1], [0], [0], [1], [0, 0, 1, 1], [], []>} : vector<8x32xf32>, vector<32x128xf32>, vector<8x128xf32> -> vector<8x128xf32>
    %124 = arith.addf %122, %123 : vector<8x128xf32>
    %125 = vector.extract_strided_slice %124 {offsets = [0, 0], sizes = [8, 32], strides = [1, 1]} : vector<8x128xf32> to vector<8x32xf32>
    %126 = arith.negf %125 : vector<8x32xf32>
    %127 = math.exp %126 : vector<8x32xf32>
    %cst_25 = arith.constant 1.000000e+00 : f32
    %128 = vector.broadcast %cst_25 : f32 to vector<8x32xf32>
    %129 = arith.addf %128, %127 : vector<8x32xf32>
    %130 = arith.divf %128, %129 : vector<8x32xf32>
    %131 = vector.extract_strided_slice %124 {offsets = [0, 32], sizes = [8, 32], strides = [1, 1]} : vector<8x128xf32> to vector<8x32xf32>
    %132 = arith.negf %131 : vector<8x32xf32>
    %133 = math.exp %132 : vector<8x32xf32>
    %cst_26 = arith.constant 1.000000e+00 : f32
    %134 = vector.broadcast %cst_26 : f32 to vector<8x32xf32>
    %135 = arith.addf %134, %133 : vector<8x32xf32>
    %136 = arith.divf %134, %135 : vector<8x32xf32>
    %137 = vector.extract_strided_slice %124 {offsets = [0, 64], sizes = [8, 32], strides = [1, 1]} : vector<8x128xf32> to vector<8x32xf32>
    %138 = math.tanh %137 : vector<8x32xf32>
    %139 = vector.extract_strided_slice %124 {offsets = [0, 96], sizes = [8, 32], strides = [1, 1]} : vector<8x128xf32> to vector<8x32xf32>
    %140 = arith.negf %139 : vector<8x32xf32>
    %141 = math.exp %140 : vector<8x32xf32>
    %cst_27 = arith.constant 1.000000e+00 : f32
    %142 = vector.broadcast %cst_27 : f32 to vector<8x32xf32>
    %143 = arith.addf %142, %141 : vector<8x32xf32>
    %144 = arith.divf %142, %143 : vector<8x32xf32>
    %145 = arith.mulf %136, %119 : vector<8x32xf32>
    %146 = arith.mulf %130, %138 : vector<8x32xf32>
    %147 = arith.addf %145, %146 : vector<8x32xf32>
    %148 = math.tanh %147 : vector<8x32xf32>
    %149 = arith.mulf %144, %148 : vector<8x32xf32>
    %150 = vector.extract_strided_slice %7 {offsets = [40, 0], sizes = [8, 128], strides = [1, 1]} : vector<64x128xf32> to vector<8x128xf32>
    %cst_28 = arith.constant dense<0.000000e+00> : vector<8x128xf32>
    %151 = tpu.matmul %149, %1, %cst_28 {dimension_numbers = #tpu.dot_dimension_numbers<[1], [0], [0], [1], [0, 0, 1, 1], [], []>} : vector<8x32xf32>, vector<32x128xf32>, vector<8x128xf32> -> vector<8x128xf32>
    %152 = arith.addf %150, %151 : vector<8x128xf32>
    %153 = vector.extract_strided_slice %152 {offsets = [0, 0], sizes = [8, 32], strides = [1, 1]} : vector<8x128xf32> to vector<8x32xf32>
    %154 = arith.negf %153 : vector<8x32xf32>
    %155 = math.exp %154 : vector<8x32xf32>
    %cst_29 = arith.constant 1.000000e+00 : f32
    %156 = vector.broadcast %cst_29 : f32 to vector<8x32xf32>
    %157 = arith.addf %156, %155 : vector<8x32xf32>
    %158 = arith.divf %156, %157 : vector<8x32xf32>
    %159 = vector.extract_strided_slice %152 {offsets = [0, 32], sizes = [8, 32], strides = [1, 1]} : vector<8x128xf32> to vector<8x32xf32>
    %160 = arith.negf %159 : vector<8x32xf32>
    %161 = math.exp %160 : vector<8x32xf32>
    %cst_30 = arith.constant 1.000000e+00 : f32
    %162 = vector.broadcast %cst_30 : f32 to vector<8x32xf32>
    %163 = arith.addf %162, %161 : vector<8x32xf32>
    %164 = arith.divf %162, %163 : vector<8x32xf32>
    %165 = vector.extract_strided_slice %152 {offsets = [0, 64], sizes = [8, 32], strides = [1, 1]} : vector<8x128xf32> to vector<8x32xf32>
    %166 = math.tanh %165 : vector<8x32xf32>
    %167 = vector.extract_strided_slice %152 {offsets = [0, 96], sizes = [8, 32], strides = [1, 1]} : vector<8x128xf32> to vector<8x32xf32>
    %168 = arith.negf %167 : vector<8x32xf32>
    %169 = math.exp %168 : vector<8x32xf32>
    %cst_31 = arith.constant 1.000000e+00 : f32
    %170 = vector.broadcast %cst_31 : f32 to vector<8x32xf32>
    %171 = arith.addf %170, %169 : vector<8x32xf32>
    %172 = arith.divf %170, %171 : vector<8x32xf32>
    %173 = arith.mulf %164, %147 : vector<8x32xf32>
    %174 = arith.mulf %158, %166 : vector<8x32xf32>
    %175 = arith.addf %173, %174 : vector<8x32xf32>
    %176 = math.tanh %175 : vector<8x32xf32>
    %177 = arith.mulf %172, %176 : vector<8x32xf32>
    %178 = vector.extract_strided_slice %7 {offsets = [48, 0], sizes = [8, 128], strides = [1, 1]} : vector<64x128xf32> to vector<8x128xf32>
    %cst_32 = arith.constant dense<0.000000e+00> : vector<8x128xf32>
    %179 = tpu.matmul %177, %1, %cst_32 {dimension_numbers = #tpu.dot_dimension_numbers<[1], [0], [0], [1], [0, 0, 1, 1], [], []>} : vector<8x32xf32>, vector<32x128xf32>, vector<8x128xf32> -> vector<8x128xf32>
    %180 = arith.addf %178, %179 : vector<8x128xf32>
    %181 = vector.extract_strided_slice %180 {offsets = [0, 0], sizes = [8, 32], strides = [1, 1]} : vector<8x128xf32> to vector<8x32xf32>
    %182 = arith.negf %181 : vector<8x32xf32>
    %183 = math.exp %182 : vector<8x32xf32>
    %cst_33 = arith.constant 1.000000e+00 : f32
    %184 = vector.broadcast %cst_33 : f32 to vector<8x32xf32>
    %185 = arith.addf %184, %183 : vector<8x32xf32>
    %186 = arith.divf %184, %185 : vector<8x32xf32>
    %187 = vector.extract_strided_slice %180 {offsets = [0, 32], sizes = [8, 32], strides = [1, 1]} : vector<8x128xf32> to vector<8x32xf32>
    %188 = arith.negf %187 : vector<8x32xf32>
    %189 = math.exp %188 : vector<8x32xf32>
    %cst_34 = arith.constant 1.000000e+00 : f32
    %190 = vector.broadcast %cst_34 : f32 to vector<8x32xf32>
    %191 = arith.addf %190, %189 : vector<8x32xf32>
    %192 = arith.divf %190, %191 : vector<8x32xf32>
    %193 = vector.extract_strided_slice %180 {offsets = [0, 64], sizes = [8, 32], strides = [1, 1]} : vector<8x128xf32> to vector<8x32xf32>
    %194 = math.tanh %193 : vector<8x32xf32>
    %195 = vector.extract_strided_slice %180 {offsets = [0, 96], sizes = [8, 32], strides = [1, 1]} : vector<8x128xf32> to vector<8x32xf32>
    %196 = arith.negf %195 : vector<8x32xf32>
    %197 = math.exp %196 : vector<8x32xf32>
    %cst_35 = arith.constant 1.000000e+00 : f32
    %198 = vector.broadcast %cst_35 : f32 to vector<8x32xf32>
    %199 = arith.addf %198, %197 : vector<8x32xf32>
    %200 = arith.divf %198, %199 : vector<8x32xf32>
    %201 = arith.mulf %192, %175 : vector<8x32xf32>
    %202 = arith.mulf %186, %194 : vector<8x32xf32>
    %203 = arith.addf %201, %202 : vector<8x32xf32>
    %204 = math.tanh %203 : vector<8x32xf32>
    %205 = arith.mulf %200, %204 : vector<8x32xf32>
    %206 = vector.extract_strided_slice %7 {offsets = [56, 0], sizes = [8, 128], strides = [1, 1]} : vector<64x128xf32> to vector<8x128xf32>
    %cst_36 = arith.constant dense<0.000000e+00> : vector<8x128xf32>
    %207 = tpu.matmul %205, %1, %cst_36 {dimension_numbers = #tpu.dot_dimension_numbers<[1], [0], [0], [1], [0, 0, 1, 1], [], []>} : vector<8x32xf32>, vector<32x128xf32>, vector<8x128xf32> -> vector<8x128xf32>
    %208 = arith.addf %206, %207 : vector<8x128xf32>
    %209 = vector.extract_strided_slice %208 {offsets = [0, 0], sizes = [8, 32], strides = [1, 1]} : vector<8x128xf32> to vector<8x32xf32>
    %210 = arith.negf %209 : vector<8x32xf32>
    %211 = math.exp %210 : vector<8x32xf32>
    %cst_37 = arith.constant 1.000000e+00 : f32
    %212 = vector.broadcast %cst_37 : f32 to vector<8x32xf32>
    %213 = arith.addf %212, %211 : vector<8x32xf32>
    %214 = arith.divf %212, %213 : vector<8x32xf32>
    %215 = vector.extract_strided_slice %208 {offsets = [0, 32], sizes = [8, 32], strides = [1, 1]} : vector<8x128xf32> to vector<8x32xf32>
    %216 = arith.negf %215 : vector<8x32xf32>
    %217 = math.exp %216 : vector<8x32xf32>
    %cst_38 = arith.constant 1.000000e+00 : f32
    %218 = vector.broadcast %cst_38 : f32 to vector<8x32xf32>
    %219 = arith.addf %218, %217 : vector<8x32xf32>
    %220 = arith.divf %218, %219 : vector<8x32xf32>
    %221 = vector.extract_strided_slice %208 {offsets = [0, 64], sizes = [8, 32], strides = [1, 1]} : vector<8x128xf32> to vector<8x32xf32>
    %222 = math.tanh %221 : vector<8x32xf32>
    %223 = vector.extract_strided_slice %208 {offsets = [0, 96], sizes = [8, 32], strides = [1, 1]} : vector<8x128xf32> to vector<8x32xf32>
    %224 = arith.negf %223 : vector<8x32xf32>
    %225 = math.exp %224 : vector<8x32xf32>
    %cst_39 = arith.constant 1.000000e+00 : f32
    %226 = vector.broadcast %cst_39 : f32 to vector<8x32xf32>
    %227 = arith.addf %226, %225 : vector<8x32xf32>
    %228 = arith.divf %226, %227 : vector<8x32xf32>
    %229 = arith.mulf %220, %203 : vector<8x32xf32>
    %230 = arith.mulf %214, %222 : vector<8x32xf32>
    %231 = arith.addf %229, %230 : vector<8x32xf32>
    %232 = math.tanh %231 : vector<8x32xf32>
    %233 = arith.mulf %228, %232 : vector<8x32xf32>
    %c0_40 = arith.constant 0 : index
    %c0_41 = arith.constant 0 : index
    %234 = vector.load %arg3[%c0_40, %c0_41] : memref<105x256xf32, #tpu.memory_space<vmem>>, vector<32x256xf32>
    %c32 = arith.constant 32 : index
    %c0_42 = arith.constant 0 : index
    %235 = vector.load %arg3[%c32, %c0_42] : memref<105x256xf32, #tpu.memory_space<vmem>>, vector<64x256xf32>
    %c96 = arith.constant 96 : index
    %c0_43 = arith.constant 0 : index
    %236 = vector.load %arg3[%c96, %c0_43] : memref<105x256xf32, #tpu.memory_space<vmem>>, vector<1x256xf32>
    %c104 = arith.constant 104 : index
    %c0_44 = arith.constant 0 : index
    %237 = vector.load %arg3[%c104, %c0_44] : memref<105x256xf32, #tpu.memory_space<vmem>>, vector<1x256xf32>
    %238 = vector.extract_strided_slice %237 {offsets = [0, 0], sizes = [1, 64], strides = [1, 1]} : vector<1x256xf32> to vector<1x64xf32>
    %239 = vector.extract_strided_slice %237 {offsets = [0, 64], sizes = [1, 1], strides = [1, 1]} : vector<1x256xf32> to vector<1x1xf32>
    %cst_45 = arith.constant dense<0.000000e+00> : vector<8x256xf32>
    %240 = tpu.matmul %233, %234, %cst_45 {dimension_numbers = #tpu.dot_dimension_numbers<[1], [0], [0], [1], [0, 0, 1, 1], [], []>} : vector<8x32xf32>, vector<32x256xf32>, vector<8x256xf32> -> vector<8x256xf32>
    %241 = vector.broadcast %236 : vector<1x256xf32> to vector<8x256xf32>
    %242 = arith.addf %240, %241 : vector<8x256xf32>
    %cst_46 = arith.constant 0.000000e+00 : f32
    %243 = vector.broadcast %cst_46 : f32 to vector<8x64xf32>
    %cst_47 = arith.constant 0.000000e+00 : f32
    %244 = vector.broadcast %cst_47 : f32 to vector<8x64xf32>
    %cst_48 = arith.constant dense<0.000000e+00> : vector<8x256xf32>
    %245 = tpu.matmul %243, %235, %cst_48 {dimension_numbers = #tpu.dot_dimension_numbers<[1], [0], [0], [1], [0, 0, 1, 1], [], []>} : vector<8x64xf32>, vector<64x256xf32>, vector<8x256xf32> -> vector<8x256xf32>
    %246 = arith.addf %242, %245 : vector<8x256xf32>
    %247 = vector.extract_strided_slice %246 {offsets = [0, 0], sizes = [8, 64], strides = [1, 1]} : vector<8x256xf32> to vector<8x64xf32>
    %248 = arith.negf %247 : vector<8x64xf32>
    %249 = math.exp %248 : vector<8x64xf32>
    %cst_49 = arith.constant 1.000000e+00 : f32
    %250 = vector.broadcast %cst_49 : f32 to vector<8x64xf32>
    %251 = arith.addf %250, %249 : vector<8x64xf32>
    %252 = arith.divf %250, %251 : vector<8x64xf32>
    %253 = vector.extract_strided_slice %246 {offsets = [0, 64], sizes = [8, 64], strides = [1, 1]} : vector<8x256xf32> to vector<8x64xf32>
    %254 = arith.negf %253 : vector<8x64xf32>
    %255 = math.exp %254 : vector<8x64xf32>
    %cst_50 = arith.constant 1.000000e+00 : f32
    %256 = vector.broadcast %cst_50 : f32 to vector<8x64xf32>
    %257 = arith.addf %256, %255 : vector<8x64xf32>
    %258 = arith.divf %256, %257 : vector<8x64xf32>
    %259 = vector.extract_strided_slice %246 {offsets = [0, 128], sizes = [8, 64], strides = [1, 1]} : vector<8x256xf32> to vector<8x64xf32>
    %260 = math.tanh %259 : vector<8x64xf32>
    %261 = vector.extract_strided_slice %246 {offsets = [0, 192], sizes = [8, 64], strides = [1, 1]} : vector<8x256xf32> to vector<8x64xf32>
    %262 = arith.negf %261 : vector<8x64xf32>
    %263 = math.exp %262 : vector<8x64xf32>
    %cst_51 = arith.constant 1.000000e+00 : f32
    %264 = vector.broadcast %cst_51 : f32 to vector<8x64xf32>
    %265 = arith.addf %264, %263 : vector<8x64xf32>
    %266 = arith.divf %264, %265 : vector<8x64xf32>
    %267 = arith.mulf %258, %244 : vector<8x64xf32>
    %268 = arith.mulf %252, %260 : vector<8x64xf32>
    %269 = arith.addf %267, %268 : vector<8x64xf32>
    %270 = math.tanh %269 : vector<8x64xf32>
    %271 = arith.mulf %266, %270 : vector<8x64xf32>
    %272 = vector.broadcast %238 : vector<1x64xf32> to vector<8x64xf32>
    %273 = arith.mulf %271, %272 : vector<8x64xf32>
    %cst_52 = arith.constant dense<0.000000e+00> : vector<8xf32>
    %274 = vector.multi_reduction <add>, %273, %cst_52 [1] : vector<8x64xf32> to vector<8xf32>
    %275 = vector.shape_cast %274 : vector<8xf32> to vector<8x1xf32>
    %cst_53 = arith.constant dense<0.000000e+00> : vector<8x256xf32>
    %276 = tpu.matmul %271, %235, %cst_53 {dimension_numbers = #tpu.dot_dimension_numbers<[1], [0], [0], [1], [0, 0, 1, 1], [], []>} : vector<8x64xf32>, vector<64x256xf32>, vector<8x256xf32> -> vector<8x256xf32>
    %277 = arith.addf %242, %276 : vector<8x256xf32>
    %278 = vector.extract_strided_slice %277 {offsets = [0, 0], sizes = [8, 64], strides = [1, 1]} : vector<8x256xf32> to vector<8x64xf32>
    %279 = arith.negf %278 : vector<8x64xf32>
    %280 = math.exp %279 : vector<8x64xf32>
    %cst_54 = arith.constant 1.000000e+00 : f32
    %281 = vector.broadcast %cst_54 : f32 to vector<8x64xf32>
    %282 = arith.addf %281, %280 : vector<8x64xf32>
    %283 = arith.divf %281, %282 : vector<8x64xf32>
    %284 = vector.extract_strided_slice %277 {offsets = [0, 64], sizes = [8, 64], strides = [1, 1]} : vector<8x256xf32> to vector<8x64xf32>
    %285 = arith.negf %284 : vector<8x64xf32>
    %286 = math.exp %285 : vector<8x64xf32>
    %cst_55 = arith.constant 1.000000e+00 : f32
    %287 = vector.broadcast %cst_55 : f32 to vector<8x64xf32>
    %288 = arith.addf %287, %286 : vector<8x64xf32>
    %289 = arith.divf %287, %288 : vector<8x64xf32>
    %290 = vector.extract_strided_slice %277 {offsets = [0, 128], sizes = [8, 64], strides = [1, 1]} : vector<8x256xf32> to vector<8x64xf32>
    %291 = math.tanh %290 : vector<8x64xf32>
    %292 = vector.extract_strided_slice %277 {offsets = [0, 192], sizes = [8, 64], strides = [1, 1]} : vector<8x256xf32> to vector<8x64xf32>
    %293 = arith.negf %292 : vector<8x64xf32>
    %294 = math.exp %293 : vector<8x64xf32>
    %cst_56 = arith.constant 1.000000e+00 : f32
    %295 = vector.broadcast %cst_56 : f32 to vector<8x64xf32>
    %296 = arith.addf %295, %294 : vector<8x64xf32>
    %297 = arith.divf %295, %296 : vector<8x64xf32>
    %298 = arith.mulf %289, %269 : vector<8x64xf32>
    %299 = arith.mulf %283, %291 : vector<8x64xf32>
    %300 = arith.addf %298, %299 : vector<8x64xf32>
    %301 = math.tanh %300 : vector<8x64xf32>
    %302 = arith.mulf %297, %301 : vector<8x64xf32>
    %303 = vector.broadcast %238 : vector<1x64xf32> to vector<8x64xf32>
    %304 = arith.mulf %302, %303 : vector<8x64xf32>
    %cst_57 = arith.constant dense<0.000000e+00> : vector<8xf32>
    %305 = vector.multi_reduction <add>, %304, %cst_57 [1] : vector<8x64xf32> to vector<8xf32>
    %306 = vector.shape_cast %305 : vector<8xf32> to vector<8x1xf32>
    %cst_58 = arith.constant dense<0.000000e+00> : vector<8x256xf32>
    %307 = tpu.matmul %302, %235, %cst_58 {dimension_numbers = #tpu.dot_dimension_numbers<[1], [0], [0], [1], [0, 0, 1, 1], [], []>} : vector<8x64xf32>, vector<64x256xf32>, vector<8x256xf32> -> vector<8x256xf32>
    %308 = arith.addf %242, %307 : vector<8x256xf32>
    %309 = vector.extract_strided_slice %308 {offsets = [0, 0], sizes = [8, 64], strides = [1, 1]} : vector<8x256xf32> to vector<8x64xf32>
    %310 = arith.negf %309 : vector<8x64xf32>
    %311 = math.exp %310 : vector<8x64xf32>
    %cst_59 = arith.constant 1.000000e+00 : f32
    %312 = vector.broadcast %cst_59 : f32 to vector<8x64xf32>
    %313 = arith.addf %312, %311 : vector<8x64xf32>
    %314 = arith.divf %312, %313 : vector<8x64xf32>
    %315 = vector.extract_strided_slice %308 {offsets = [0, 64], sizes = [8, 64], strides = [1, 1]} : vector<8x256xf32> to vector<8x64xf32>
    %316 = arith.negf %315 : vector<8x64xf32>
    %317 = math.exp %316 : vector<8x64xf32>
    %cst_60 = arith.constant 1.000000e+00 : f32
    %318 = vector.broadcast %cst_60 : f32 to vector<8x64xf32>
    %319 = arith.addf %318, %317 : vector<8x64xf32>
    %320 = arith.divf %318, %319 : vector<8x64xf32>
    %321 = vector.extract_strided_slice %308 {offsets = [0, 128], sizes = [8, 64], strides = [1, 1]} : vector<8x256xf32> to vector<8x64xf32>
    %322 = math.tanh %321 : vector<8x64xf32>
    %323 = vector.extract_strided_slice %308 {offsets = [0, 192], sizes = [8, 64], strides = [1, 1]} : vector<8x256xf32> to vector<8x64xf32>
    %324 = arith.negf %323 : vector<8x64xf32>
    %325 = math.exp %324 : vector<8x64xf32>
    %cst_61 = arith.constant 1.000000e+00 : f32
    %326 = vector.broadcast %cst_61 : f32 to vector<8x64xf32>
    %327 = arith.addf %326, %325 : vector<8x64xf32>
    %328 = arith.divf %326, %327 : vector<8x64xf32>
    %329 = arith.mulf %320, %300 : vector<8x64xf32>
    %330 = arith.mulf %314, %322 : vector<8x64xf32>
    %331 = arith.addf %329, %330 : vector<8x64xf32>
    %332 = math.tanh %331 : vector<8x64xf32>
    %333 = arith.mulf %328, %332 : vector<8x64xf32>
    %334 = vector.broadcast %238 : vector<1x64xf32> to vector<8x64xf32>
    %335 = arith.mulf %333, %334 : vector<8x64xf32>
    %cst_62 = arith.constant dense<0.000000e+00> : vector<8xf32>
    %336 = vector.multi_reduction <add>, %335, %cst_62 [1] : vector<8x64xf32> to vector<8xf32>
    %337 = vector.shape_cast %336 : vector<8xf32> to vector<8x1xf32>
    %cst_63 = arith.constant dense<0.000000e+00> : vector<8x256xf32>
    %338 = tpu.matmul %333, %235, %cst_63 {dimension_numbers = #tpu.dot_dimension_numbers<[1], [0], [0], [1], [0, 0, 1, 1], [], []>} : vector<8x64xf32>, vector<64x256xf32>, vector<8x256xf32> -> vector<8x256xf32>
    %339 = arith.addf %242, %338 : vector<8x256xf32>
    %340 = vector.extract_strided_slice %339 {offsets = [0, 0], sizes = [8, 64], strides = [1, 1]} : vector<8x256xf32> to vector<8x64xf32>
    %341 = arith.negf %340 : vector<8x64xf32>
    %342 = math.exp %341 : vector<8x64xf32>
    %cst_64 = arith.constant 1.000000e+00 : f32
    %343 = vector.broadcast %cst_64 : f32 to vector<8x64xf32>
    %344 = arith.addf %343, %342 : vector<8x64xf32>
    %345 = arith.divf %343, %344 : vector<8x64xf32>
    %346 = vector.extract_strided_slice %339 {offsets = [0, 64], sizes = [8, 64], strides = [1, 1]} : vector<8x256xf32> to vector<8x64xf32>
    %347 = arith.negf %346 : vector<8x64xf32>
    %348 = math.exp %347 : vector<8x64xf32>
    %cst_65 = arith.constant 1.000000e+00 : f32
    %349 = vector.broadcast %cst_65 : f32 to vector<8x64xf32>
    %350 = arith.addf %349, %348 : vector<8x64xf32>
    %351 = arith.divf %349, %350 : vector<8x64xf32>
    %352 = vector.extract_strided_slice %339 {offsets = [0, 128], sizes = [8, 64], strides = [1, 1]} : vector<8x256xf32> to vector<8x64xf32>
    %353 = math.tanh %352 : vector<8x64xf32>
    %354 = vector.extract_strided_slice %339 {offsets = [0, 192], sizes = [8, 64], strides = [1, 1]} : vector<8x256xf32> to vector<8x64xf32>
    %355 = arith.negf %354 : vector<8x64xf32>
    %356 = math.exp %355 : vector<8x64xf32>
    %cst_66 = arith.constant 1.000000e+00 : f32
    %357 = vector.broadcast %cst_66 : f32 to vector<8x64xf32>
    %358 = arith.addf %357, %356 : vector<8x64xf32>
    %359 = arith.divf %357, %358 : vector<8x64xf32>
    %360 = arith.mulf %351, %331 : vector<8x64xf32>
    %361 = arith.mulf %345, %353 : vector<8x64xf32>
    %362 = arith.addf %360, %361 : vector<8x64xf32>
    %363 = math.tanh %362 : vector<8x64xf32>
    %364 = arith.mulf %359, %363 : vector<8x64xf32>
    %365 = vector.broadcast %238 : vector<1x64xf32> to vector<8x64xf32>
    %366 = arith.mulf %364, %365 : vector<8x64xf32>
    %cst_67 = arith.constant dense<0.000000e+00> : vector<8xf32>
    %367 = vector.multi_reduction <add>, %366, %cst_67 [1] : vector<8x64xf32> to vector<8xf32>
    %368 = vector.shape_cast %367 : vector<8xf32> to vector<8x1xf32>
    %cst_68 = arith.constant dense<0.000000e+00> : vector<8x256xf32>
    %369 = tpu.matmul %364, %235, %cst_68 {dimension_numbers = #tpu.dot_dimension_numbers<[1], [0], [0], [1], [0, 0, 1, 1], [], []>} : vector<8x64xf32>, vector<64x256xf32>, vector<8x256xf32> -> vector<8x256xf32>
    %370 = arith.addf %242, %369 : vector<8x256xf32>
    %371 = vector.extract_strided_slice %370 {offsets = [0, 0], sizes = [8, 64], strides = [1, 1]} : vector<8x256xf32> to vector<8x64xf32>
    %372 = arith.negf %371 : vector<8x64xf32>
    %373 = math.exp %372 : vector<8x64xf32>
    %cst_69 = arith.constant 1.000000e+00 : f32
    %374 = vector.broadcast %cst_69 : f32 to vector<8x64xf32>
    %375 = arith.addf %374, %373 : vector<8x64xf32>
    %376 = arith.divf %374, %375 : vector<8x64xf32>
    %377 = vector.extract_strided_slice %370 {offsets = [0, 64], sizes = [8, 64], strides = [1, 1]} : vector<8x256xf32> to vector<8x64xf32>
    %378 = arith.negf %377 : vector<8x64xf32>
    %379 = math.exp %378 : vector<8x64xf32>
    %cst_70 = arith.constant 1.000000e+00 : f32
    %380 = vector.broadcast %cst_70 : f32 to vector<8x64xf32>
    %381 = arith.addf %380, %379 : vector<8x64xf32>
    %382 = arith.divf %380, %381 : vector<8x64xf32>
    %383 = vector.extract_strided_slice %370 {offsets = [0, 128], sizes = [8, 64], strides = [1, 1]} : vector<8x256xf32> to vector<8x64xf32>
    %384 = math.tanh %383 : vector<8x64xf32>
    %385 = vector.extract_strided_slice %370 {offsets = [0, 192], sizes = [8, 64], strides = [1, 1]} : vector<8x256xf32> to vector<8x64xf32>
    %386 = arith.negf %385 : vector<8x64xf32>
    %387 = math.exp %386 : vector<8x64xf32>
    %cst_71 = arith.constant 1.000000e+00 : f32
    %388 = vector.broadcast %cst_71 : f32 to vector<8x64xf32>
    %389 = arith.addf %388, %387 : vector<8x64xf32>
    %390 = arith.divf %388, %389 : vector<8x64xf32>
    %391 = arith.mulf %382, %362 : vector<8x64xf32>
    %392 = arith.mulf %376, %384 : vector<8x64xf32>
    %393 = arith.addf %391, %392 : vector<8x64xf32>
    %394 = math.tanh %393 : vector<8x64xf32>
    %395 = arith.mulf %390, %394 : vector<8x64xf32>
    %396 = vector.broadcast %238 : vector<1x64xf32> to vector<8x64xf32>
    %397 = arith.mulf %395, %396 : vector<8x64xf32>
    %cst_72 = arith.constant dense<0.000000e+00> : vector<8xf32>
    %398 = vector.multi_reduction <add>, %397, %cst_72 [1] : vector<8x64xf32> to vector<8xf32>
    %399 = vector.shape_cast %398 : vector<8xf32> to vector<8x1xf32>
    %cst_73 = arith.constant dense<0.000000e+00> : vector<8x256xf32>
    %400 = tpu.matmul %395, %235, %cst_73 {dimension_numbers = #tpu.dot_dimension_numbers<[1], [0], [0], [1], [0, 0, 1, 1], [], []>} : vector<8x64xf32>, vector<64x256xf32>, vector<8x256xf32> -> vector<8x256xf32>
    %401 = arith.addf %242, %400 : vector<8x256xf32>
    %402 = vector.extract_strided_slice %401 {offsets = [0, 0], sizes = [8, 64], strides = [1, 1]} : vector<8x256xf32> to vector<8x64xf32>
    %403 = arith.negf %402 : vector<8x64xf32>
    %404 = math.exp %403 : vector<8x64xf32>
    %cst_74 = arith.constant 1.000000e+00 : f32
    %405 = vector.broadcast %cst_74 : f32 to vector<8x64xf32>
    %406 = arith.addf %405, %404 : vector<8x64xf32>
    %407 = arith.divf %405, %406 : vector<8x64xf32>
    %408 = vector.extract_strided_slice %401 {offsets = [0, 64], sizes = [8, 64], strides = [1, 1]} : vector<8x256xf32> to vector<8x64xf32>
    %409 = arith.negf %408 : vector<8x64xf32>
    %410 = math.exp %409 : vector<8x64xf32>
    %cst_75 = arith.constant 1.000000e+00 : f32
    %411 = vector.broadcast %cst_75 : f32 to vector<8x64xf32>
    %412 = arith.addf %411, %410 : vector<8x64xf32>
    %413 = arith.divf %411, %412 : vector<8x64xf32>
    %414 = vector.extract_strided_slice %401 {offsets = [0, 128], sizes = [8, 64], strides = [1, 1]} : vector<8x256xf32> to vector<8x64xf32>
    %415 = math.tanh %414 : vector<8x64xf32>
    %416 = vector.extract_strided_slice %401 {offsets = [0, 192], sizes = [8, 64], strides = [1, 1]} : vector<8x256xf32> to vector<8x64xf32>
    %417 = arith.negf %416 : vector<8x64xf32>
    %418 = math.exp %417 : vector<8x64xf32>
    %cst_76 = arith.constant 1.000000e+00 : f32
    %419 = vector.broadcast %cst_76 : f32 to vector<8x64xf32>
    %420 = arith.addf %419, %418 : vector<8x64xf32>
    %421 = arith.divf %419, %420 : vector<8x64xf32>
    %422 = arith.mulf %413, %393 : vector<8x64xf32>
    %423 = arith.mulf %407, %415 : vector<8x64xf32>
    %424 = arith.addf %422, %423 : vector<8x64xf32>
    %425 = math.tanh %424 : vector<8x64xf32>
    %426 = arith.mulf %421, %425 : vector<8x64xf32>
    %427 = vector.broadcast %238 : vector<1x64xf32> to vector<8x64xf32>
    %428 = arith.mulf %426, %427 : vector<8x64xf32>
    %cst_77 = arith.constant dense<0.000000e+00> : vector<8xf32>
    %429 = vector.multi_reduction <add>, %428, %cst_77 [1] : vector<8x64xf32> to vector<8xf32>
    %430 = vector.shape_cast %429 : vector<8xf32> to vector<8x1xf32>
    %cst_78 = arith.constant dense<0.000000e+00> : vector<8x256xf32>
    %431 = tpu.matmul %426, %235, %cst_78 {dimension_numbers = #tpu.dot_dimension_numbers<[1], [0], [0], [1], [0, 0, 1, 1], [], []>} : vector<8x64xf32>, vector<64x256xf32>, vector<8x256xf32> -> vector<8x256xf32>
    %432 = arith.addf %242, %431 : vector<8x256xf32>
    %433 = vector.extract_strided_slice %432 {offsets = [0, 0], sizes = [8, 64], strides = [1, 1]} : vector<8x256xf32> to vector<8x64xf32>
    %434 = arith.negf %433 : vector<8x64xf32>
    %435 = math.exp %434 : vector<8x64xf32>
    %cst_79 = arith.constant 1.000000e+00 : f32
    %436 = vector.broadcast %cst_79 : f32 to vector<8x64xf32>
    %437 = arith.addf %436, %435 : vector<8x64xf32>
    %438 = arith.divf %436, %437 : vector<8x64xf32>
    %439 = vector.extract_strided_slice %432 {offsets = [0, 64], sizes = [8, 64], strides = [1, 1]} : vector<8x256xf32> to vector<8x64xf32>
    %440 = arith.negf %439 : vector<8x64xf32>
    %441 = math.exp %440 : vector<8x64xf32>
    %cst_80 = arith.constant 1.000000e+00 : f32
    %442 = vector.broadcast %cst_80 : f32 to vector<8x64xf32>
    %443 = arith.addf %442, %441 : vector<8x64xf32>
    %444 = arith.divf %442, %443 : vector<8x64xf32>
    %445 = vector.extract_strided_slice %432 {offsets = [0, 128], sizes = [8, 64], strides = [1, 1]} : vector<8x256xf32> to vector<8x64xf32>
    %446 = math.tanh %445 : vector<8x64xf32>
    %447 = vector.extract_strided_slice %432 {offsets = [0, 192], sizes = [8, 64], strides = [1, 1]} : vector<8x256xf32> to vector<8x64xf32>
    %448 = arith.negf %447 : vector<8x64xf32>
    %449 = math.exp %448 : vector<8x64xf32>
    %cst_81 = arith.constant 1.000000e+00 : f32
    %450 = vector.broadcast %cst_81 : f32 to vector<8x64xf32>
    %451 = arith.addf %450, %449 : vector<8x64xf32>
    %452 = arith.divf %450, %451 : vector<8x64xf32>
    %453 = arith.mulf %444, %424 : vector<8x64xf32>
    %454 = arith.mulf %438, %446 : vector<8x64xf32>
    %455 = arith.addf %453, %454 : vector<8x64xf32>
    %456 = math.tanh %455 : vector<8x64xf32>
    %457 = arith.mulf %452, %456 : vector<8x64xf32>
    %458 = vector.broadcast %238 : vector<1x64xf32> to vector<8x64xf32>
    %459 = arith.mulf %457, %458 : vector<8x64xf32>
    %cst_82 = arith.constant dense<0.000000e+00> : vector<8xf32>
    %460 = vector.multi_reduction <add>, %459, %cst_82 [1] : vector<8x64xf32> to vector<8xf32>
    %461 = vector.shape_cast %460 : vector<8xf32> to vector<8x1xf32>
    %cst_83 = arith.constant dense<0.000000e+00> : vector<8x256xf32>
    %462 = tpu.matmul %457, %235, %cst_83 {dimension_numbers = #tpu.dot_dimension_numbers<[1], [0], [0], [1], [0, 0, 1, 1], [], []>} : vector<8x64xf32>, vector<64x256xf32>, vector<8x256xf32> -> vector<8x256xf32>
    %463 = arith.addf %242, %462 : vector<8x256xf32>
    %464 = vector.extract_strided_slice %463 {offsets = [0, 0], sizes = [8, 64], strides = [1, 1]} : vector<8x256xf32> to vector<8x64xf32>
    %465 = arith.negf %464 : vector<8x64xf32>
    %466 = math.exp %465 : vector<8x64xf32>
    %cst_84 = arith.constant 1.000000e+00 : f32
    %467 = vector.broadcast %cst_84 : f32 to vector<8x64xf32>
    %468 = arith.addf %467, %466 : vector<8x64xf32>
    %469 = arith.divf %467, %468 : vector<8x64xf32>
    %470 = vector.extract_strided_slice %463 {offsets = [0, 64], sizes = [8, 64], strides = [1, 1]} : vector<8x256xf32> to vector<8x64xf32>
    %471 = arith.negf %470 : vector<8x64xf32>
    %472 = math.exp %471 : vector<8x64xf32>
    %cst_85 = arith.constant 1.000000e+00 : f32
    %473 = vector.broadcast %cst_85 : f32 to vector<8x64xf32>
    %474 = arith.addf %473, %472 : vector<8x64xf32>
    %475 = arith.divf %473, %474 : vector<8x64xf32>
    %476 = vector.extract_strided_slice %463 {offsets = [0, 128], sizes = [8, 64], strides = [1, 1]} : vector<8x256xf32> to vector<8x64xf32>
    %477 = math.tanh %476 : vector<8x64xf32>
    %478 = vector.extract_strided_slice %463 {offsets = [0, 192], sizes = [8, 64], strides = [1, 1]} : vector<8x256xf32> to vector<8x64xf32>
    %479 = arith.negf %478 : vector<8x64xf32>
    %480 = math.exp %479 : vector<8x64xf32>
    %cst_86 = arith.constant 1.000000e+00 : f32
    %481 = vector.broadcast %cst_86 : f32 to vector<8x64xf32>
    %482 = arith.addf %481, %480 : vector<8x64xf32>
    %483 = arith.divf %481, %482 : vector<8x64xf32>
    %484 = arith.mulf %475, %455 : vector<8x64xf32>
    %485 = arith.mulf %469, %477 : vector<8x64xf32>
    %486 = arith.addf %484, %485 : vector<8x64xf32>
    %487 = math.tanh %486 : vector<8x64xf32>
    %488 = arith.mulf %483, %487 : vector<8x64xf32>
    %489 = vector.broadcast %238 : vector<1x64xf32> to vector<8x64xf32>
    %490 = arith.mulf %488, %489 : vector<8x64xf32>
    %cst_87 = arith.constant dense<0.000000e+00> : vector<8xf32>
    %491 = vector.multi_reduction <add>, %490, %cst_87 [1] : vector<8x64xf32> to vector<8xf32>
    %492 = vector.shape_cast %491 : vector<8xf32> to vector<8x1xf32>
    %493 = tpu.concatenate %275, %306, %337, %368, %399, %430, %461, %492 in 1 : vector<8x1xf32>, vector<8x1xf32>, vector<8x1xf32>, vector<8x1xf32>, vector<8x1xf32>, vector<8x1xf32>, vector<8x1xf32>, vector<8x1xf32> -> vector<8x8xf32>
    %494 = vector.broadcast %239 : vector<1x1xf32> to vector<8x8xf32>
    %495 = arith.addf %493, %494 : vector<8x8xf32>
    %c0_88 = arith.constant 0 : index
    %c0_89 = arith.constant 0 : index
    %496 = vector.load %arg4[%c0_88, %c0_89] : memref<8x8xf32, #tpu.memory_space<vmem>>, vector<8x8xf32>
    tpu.vector_store %arg4[%c0_88, %c0_89], %495 {strides = array<i32>} : memref<8x8xf32, #tpu.memory_space<vmem>>, vector<8x8xf32>,
    return
  }
  func.func @transform_0(%arg0: i32) -> (i32, i32, i32) {
    %c0_i32 = arith.constant 0 : i32
    %c0_i32_0 = arith.constant 0 : i32
    %c0_i32_1 = arith.constant 0 : i32
    return %c0_i32, %arg0, %c0_i32_0 : i32, i32, i32
  }
  func.func @transform_1(%arg0: i32) -> (i32, i32) {
    %c0_i32 = arith.constant 0 : i32
    %c0_i32_0 = arith.constant 0 : i32
    %c0_i32_1 = arith.constant 0 : i32
    return %c0_i32, %c0_i32_0 : i32, i32
  }
  func.func @transform_2(%arg0: i32) -> (i32, i32) {
    %c0_i32 = arith.constant 0 : i32
    %c0_i32_0 = arith.constant 0 : i32
    %c0_i32_1 = arith.constant 0 : i32
    return %c0_i32, %c0_i32_0 : i32, i32
  }
  func.func @transform_3(%arg0: i32) -> (i32, i32) {
    %c0_i32 = arith.constant 0 : i32
    %c0_i32_0 = arith.constant 0 : i32
    return %arg0, %c0_i32 : i32, i32
  }
}

</mosaic_0001>

<llo_original>
// kernel: tpu_custom_call.1
$region0: #{tpu_custom_call.1}
  #allocation0 [shape = 'u32[]', space=smem, size = 0x4, offset = 0x4, fixed_abs, tag = 'smem constant byte address 0x4 - core index']
  #allocation1 [shape = 'u32[72,128]{1,0:T(1,128)}', space=vmem, size = 0x9000, scoped, tag = 'internal scratch']
  %s0 = inlined_call_operand.vmem [shape: f32[8,16,8], index: 0, kind: input, shape index: {}]
  %s1 = inlined_call_operand.vmem [shape: f32[41,128], index: 1, kind: input, shape index: {}]
  %s2 = inlined_call_operand.hbm [shape: f32[105,256], index: 2, kind: input, shape index: {}]
  %s3 = inlined_call_operand.vmem [shape: f32[16,8], index: 3, kind: output, shape index: {}]
  %s4 = sld [smem:[#allocation0]]
  $region87: #{tpu_custom_call.1} parent=0
    _
  %s6 = ssub.s32 1, %s4
  %s7 = scalar_select 0, %s6, %s4
  $region1: #{tpu_custom_call.1} parent=0
    #allocation2 [shape = 'u8[65536]{0}', space=vmem, size = 0x10000, scoped, tag = 'input window, operand 0']
    #allocation3 [shape = 'u8[114688]{0}', space=vmem, size = 0x1c000, scoped, tag = 'input window, operand 2, single buffered']
    #allocation4 [shape = 's32[2]{0}', space=sflag, size = 0x8, scoped, tag = 'scoped memory for tpu_custom_call.1']
    %8 = vsyncpa [#allocation4], 0
    loop: start=0, step=1, limit=4
    $region2: #{tpu_custom_call.1} parent=1 // loop_pre_header
      _
    $region3: #{tpu_custom_call.1} parent=1 // loop_header
      %s10 = sphi 0, %s14
      %p11 = scmp.ge.s32.totalorder %s10, 4
      %s20 = sphi 0, %s22
      %s23 = sphi 0, %s20
      %s24 = sphi 0, %s23
      %s40 = sphi 0, %s24
      %s44 = sphi 0, %s44
      %s46 = sphi 0, %s44
      %s47 = sphi 0, %s46
      %s61 = sphi 0, %s47
      %s65 = sphi 0, %s65
      %s67 = sphi 0, %s65
      %s68 = sphi 0, %s67
      %s82 = sphi 0, %s68
      %s88 = sphi 0, %s90
      %s91 = sphi 0, %s88
      %s92 = sphi 0, %s91
      %s108 = sphi 0, %s92
    $region4: #{tpu_custom_call.1} parent=1 // loop_header_branch
      %13 = sbr.rel (%p11) target = $region8
    $region5: #{tpu_custom_call.1} parent=1 // loop_body
      %s15 = ssub.s32 %s10, 1
      %s16 = ssub.s32 %s10, 2
      %s17 = sadd.s32 %s10, 1
      %s18 = ssub.s32 %s10, %s17
      %p19 = scmp.eq.s32.totalorder %s18, 0
      %s21 = sadd.s32 %s20, 1
      %s22 = scalar_select %p19, %s20, %s21
      %p25 = pneg %p19
      %p26 = scmp.eq.s32.totalorder %s10, 1
      %p27 = por %p25, %p26
      %p28 = scmp.ne.s32.totalorder %s20, %s23
      %p29 = scmp.eq.s32.totalorder %s10, 0
      %p30 = por %p28, %p29
      %p31 = scmp.ne.s32.totalorder %s20, %s23
      %p32 = scmp.eq.s32.totalorder %s15, 1
      %p33 = por %p31, %p32
      %p34 = scmp.ne.s32.totalorder %s23, %s24
      %p35 = scmp.eq.s32.totalorder %s15, 0
      %p36 = por %p34, %p35
      %p37 = scmp.ne.s32.totalorder %s23, %s24
      %p38 = scmp.eq.s32.totalorder %s16, 1
      %p39 = por %p37, %p38
      %p41 = scmp.ne.s32.totalorder %s24, %s40
      %p42 = scmp.eq.s32.totalorder %s16, 0
      %p43 = por %p41, %p42
      %s45 = sadd.s32 %s44, 1
      %p48 = scmp.eq.s32.totalorder %s10, 1
      %p49 = scmp.ne.s32.totalorder %s44, %s46
      %p50 = scmp.eq.s32.totalorder %s10, 0
      %p51 = por %p49, %p50
      %p52 = scmp.ne.s32.totalorder %s44, %s46
      %p53 = scmp.eq.s32.totalorder %s15, 1
      %p54 = por %p52, %p53
      %p55 = scmp.ne.s32.totalorder %s46, %s47
      %p56 = scmp.eq.s32.totalorder %s15, 0
      %p57 = por %p55, %p56
      %p58 = scmp.ne.s32.totalorder %s46, %s47
      %p59 = scmp.eq.s32.totalorder %s16, 1
      %p60 = por %p58, %p59
      %p62 = scmp.ne.s32.totalorder %s47, %s61
      %p63 = scmp.eq.s32.totalorder %s16, 0
      %p64 = por %p62, %p63
      %s66 = sadd.s32 %s65, 1
      %p69 = scmp.eq.s32.totalorder %s10, 1
      %p70 = scmp.ne.s32.totalorder %s65, %s67
      %p71 = scmp.eq.s32.totalorder %s10, 0
      %p72 = por %p70, %p71
      %p73 = scmp.ne.s32.totalorder %s65, %s67
      %p74 = scmp.eq.s32.totalorder %s15, 1
      %p75 = por %p73, %p74
      %p76 = scmp.ne.s32.totalorder %s67, %s68
      %p77 = scmp.eq.s32.totalorder %s15, 0
      %p78 = por %p76, %p77
      %p79 = scmp.ne.s32.totalorder %s67, %s68
      %p80 = scmp.eq.s32.totalorder %s16, 1
      %p81 = por %p79, %p80
      %p83 = scmp.ne.s32.totalorder %s68, %s82
      %p84 = scmp.eq.s32.totalorder %s16, 0
      %p85 = por %p83, %p84
      %s86 = ssub.s32 %s10, %s17
      %p87 = scmp.eq.s32.totalorder %s86, 0
      %s89 = sadd.s32 %s88, 1
      %s90 = scalar_select %p87, %s88, %s89
      %p93 = pneg %p87
      %p94 = scmp.eq.s32.totalorder %s10, 1
      %p95 = por %p93, %p94
      %p96 = scmp.ne.s32.totalorder %s88, %s91
      %p97 = scmp.eq.s32.totalorder %s10, 0
      %p98 = por %p96, %p97
      %p99 = scmp.ne.s32.totalorder %s88, %s91
      %p100 = scmp.eq.s32.totalorder %s15, 1
      %p101 = por %p99, %p100
      %p102 = scmp.ne.s32.totalorder %s91, %s92
      %p103 = scmp.eq.s32.totalorder %s15, 0
      %p104 = por %p102, %p103
      %p105 = scmp.ne.s32.totalorder %s91, %s92
      %p106 = scmp.eq.s32.totalorder %s16, 1
      %p107 = por %p105, %p106
      %p109 = scmp.ne.s32.totalorder %s92, %s108
      %p110 = scmp.eq.s32.totalorder %s16, 0
      %p111 = por %p109, %p110
      %p112 = scmp.le.s32.totalorder 1, %s10
      %p113 = scmp.lt.s32.totalorder %s10, 3
      %p114 = pnand %p112, %p113
      %p115 = pneg %p114
      // Predicated region
      $region9: #{tpu_custom_call.1} parent=5 // pred_check
        _
      $region10: #{tpu_custom_call.1} parent=5 // pred_check_branch
        %117 = sbr.rel (%p114) target = $region12
      $region11: #{tpu_custom_call.1} parent=5 // pred_region
        %s118 = ssub.s32 %s10, 1
        // Predicated region
        $region13: #{tpu_custom_call.1} parent=11 // pred_check
          %p119 = pneg %p57
        $region14: #{tpu_custom_call.1} parent=11 // pred_check_branch
          %121 = sbr.rel (%p119) target = $region16
        $region15: #{tpu_custom_call.1} parent=11 // pred_region
          _
        $region16: #{tpu_custom_call.1} parent=11 // pred_fallthru
          _
        // Predicated region
        $region17: #{tpu_custom_call.1} parent=11 // pred_check
          %p122 = pneg %p78
        $region18: #{tpu_custom_call.1} parent=11 // pred_check_branch
          %124 = sbr.rel (%p122) target = $region20
        $region19: #{tpu_custom_call.1} parent=11 // pred_region
          %126 = vsyncadd [#allocation4], 0
          %s127 = sshll.u32 %s2, 4
          %s128 = int_to_ptr.hbm [resolvable:$true] %s127
          %s129 = sshll.u32 [#allocation3], 4
          %s130 = int_to_ptr.vmem [resolvable:$true] %s129
          %135 = dma.hbm_to_vmem [thread:$0]  %s128, 3584, %s130, [#allocation4], 256, 256, 16
        $region20: #{tpu_custom_call.1} parent=11 // pred_fallthru
          _
      $region12: #{tpu_custom_call.1} parent=5 // pred_fallthru
        _
      %p136 = scmp.lt.s32.totalorder %s10, 2
      // Predicated region
      $region21: #{tpu_custom_call.1} parent=5 // pred_check
        %p137 = pneg %p136
      $region22: #{tpu_custom_call.1} parent=5 // pred_check_branch
        %139 = sbr.rel (%p137) target = $region24
      $region23: #{tpu_custom_call.1} parent=5 // pred_region
        // Predicated region
        $region25: #{tpu_custom_call.1} parent=23 // pred_check
          %p140 = pneg %p30
        $region26: #{tpu_custom_call.1} parent=23 // pred_check_branch
          %142 = sbr.rel (%p140) target = $region28
        $region27: #{tpu_custom_call.1} parent=23 // pred_region
          %s143 = sand.u32 %s20, 1
          %s144 = sand.u32 %s20, 1
          %s145 = smul.addr %s144, 64
          %s146 = scalar_lea.vmem [#allocation2], %s145
          %s147 = smul.addr %s10, 8
          %s148 = scalar_lea.vmem %s0, %s147
          // Predicated region
          $region29: #{tpu_custom_call.1} parent=27 // pred_check
            _
          $region30: #{tpu_custom_call.1} parent=27 // pred_check_branch
            %150 = sbr.rel (0) target = $region32
          $region31: #{tpu_custom_call.1} parent=27 // pred_region
            // Predicated region
            $region33: #{tpu_custom_call.1} parent=31 // pred_check
              _
            $region34: #{tpu_custom_call.1} parent=31 // pred_check_branch
              %152 = sbr.rel (0) target = $region36
            $region35: #{tpu_custom_call.1} parent=31 // pred_region
              // Predicated region
              $region48: #{tpu_custom_call.1} parent=35 // pred_check
                _
              $region49: #{tpu_custom_call.1} parent=35 // pred_check_branch
                %182 = sbr.rel (0) target = $region51
              $region50: #{tpu_custom_call.1} parent=35 // pred_region
                loop: start=0, step=1, limit=1
                $region52: #{tpu_custom_call.1} parent=50 // loop_pre_header
                  _
                $region53: #{tpu_custom_call.1} parent=50 // loop_header
                  %s184 = sphi 0, %s188
                  %p185 = scmp.ge.s32.totalorder %s184, 1
                  %s189 = sphi %s148, %s148
                  %s190 = sphi %s146, %s146
                $region54: #{tpu_custom_call.1} parent=50 // loop_header_branch
                  %187 = sbr.rel (%p185) target = $region58
                $region55: #{tpu_custom_call.1} parent=50 // loop_body
                  %v191 = vld [vmem:[%s189] sm:$0xff]
                  %192 = vst [vmem:[%s190] sm:$0xff] %v191
                  %v193 = vld [vmem:[%s189 + $0x10] sm:$0xff]
                  %194 = vst [vmem:[%s190 + $0x8] sm:$0xff] %v193
                  %v195 = vld [vmem:[%s189 + $0x20] sm:$0xff]
                  %196 = vst [vmem:[%s190 + $0x10] sm:$0xff] %v195
                  %v197 = vld [vmem:[%s189 + $0x30] sm:$0xff]
                  %198 = vst [vmem:[%s190 + $0x18] sm:$0xff] %v197
                  %v199 = vld [vmem:[%s189 + $0x40] sm:$0xff]
                  %200 = vst [vmem:[%s190 + $0x20] sm:$0xff] %v199
                  %v201 = vld [vmem:[%s189 + $0x50] sm:$0xff]
                  %202 = vst [vmem:[%s190 + $0x28] sm:$0xff] %v201
                  %v203 = vld [vmem:[%s189 + $0x60] sm:$0xff]
                  %204 = vst [vmem:[%s190 + $0x30] sm:$0xff] %v203
                  %v205 = vld [vmem:[%s189 + $0x70] sm:$0xff]
                  %206 = vst [vmem:[%s190 + $0x38] sm:$0xff] %v205
                $region56: #{tpu_custom_call.1} parent=50 // loop_footer
                  %s188 = sadd.s32 1, %s184
                $region57: #{tpu_custom_call.1} parent=50 // loop_footer_branch
                  %183 = sbr.rel target = $region53
                $region58: #{tpu_custom_call.1} parent=50 // loop_exit
                  _
              $region51: #{tpu_custom_call.1} parent=35 // pred_fallthru
                _
              // Predicated region
              $region59: #{tpu_custom_call.1} parent=35 // pred_check
                _
              $region60: #{tpu_custom_call.1} parent=35 // pred_check_branch
                %208 = sbr.rel target = $region62
              $region61: #{tpu_custom_call.1} parent=35 // pred_region
                _
              $region62: #{tpu_custom_call.1} parent=35 // pred_fallthru
                _
            $region36: #{tpu_custom_call.1} parent=31 // pred_fallthru
              _
            // Predicated region
            $region37: #{tpu_custom_call.1} parent=31 // pred_check
              _
            $region38: #{tpu_custom_call.1} parent=31 // pred_check_branch
              %154 = sbr.rel target = $region40
            $region39: #{tpu_custom_call.1} parent=31 // pred_region
              %s156 = ssub.s32 256, 1
              loop: start=0, step=1, limit=1
              $region41: #{tpu_custom_call.1} parent=39 // loop_pre_header
                _
              $region42: #{tpu_custom_call.1} parent=39 // loop_header
                %s158 = sphi 0, %s162
                %p159 = scmp.ge.s32.totalorder %s158, 1
                %s163 = sphi %s148, %s148
                %s164 = sphi %s146, %s146
              $region43: #{tpu_custom_call.1} parent=39 // loop_header_branch
                %161 = sbr.rel (%p159) target = $region47
              $region44: #{tpu_custom_call.1} parent=39 // loop_body
                %v165 = vld [vmem:[%s163] sm:%s156]
                %166 = vst [vmem:[%s164] sm:%s156] %v165
                %v167 = vld [vmem:[%s163 + $0x10] sm:%s156]
                %168 = vst [vmem:[%s164 + $0x8] sm:%s156] %v167
                %v169 = vld [vmem:[%s163 + $0x20] sm:%s156]
                %170 = vst [vmem:[%s164 + $0x10] sm:%s156] %v169
                %v171 = vld [vmem:[%s163 + $0x30] sm:%s156]
                %172 = vst [vmem:[%s164 + $0x18] sm:%s156] %v171
                %v173 = vld [vmem:[%s163 + $0x40] sm:%s156]
                %174 = vst [vmem:[%s164 + $0x20] sm:%s156] %v173
                %v175 = vld [vmem:[%s163 + $0x50] sm:%s156]
                %176 = vst [vmem:[%s164 + $0x28] sm:%s156] %v175
                %v177 = vld [vmem:[%s163 + $0x60] sm:%s156]
                %178 = vst [vmem:[%s164 + $0x30] sm:%s156] %v177
                %v179 = vld [vmem:[%s163 + $0x70] sm:%s156]
                %180 = vst [vmem:[%s164 + $0x38] sm:%s156] %v179
              $region45: #{tpu_custom_call.1} parent=39 // loop_footer
                %s162 = sadd.s32 1, %s158
              $region46: #{tpu_custom_call.1} parent=39 // loop_footer_branch
                %157 = sbr.rel target = $region42
              $region47: #{tpu_custom_call.1} parent=39 // loop_exit
                _
            $region40: #{tpu_custom_call.1} parent=31 // pred_fallthru
              _
          $region32: #{tpu_custom_call.1} parent=27 // pred_fallthru
            _
          %209 = vnop
        $region28: #{tpu_custom_call.1} parent=23 // pred_fallthru
          _
      $region24: #{tpu_custom_call.1} parent=5 // pred_fallthru
        _
      %p210 = scmp.le.s32.totalorder 1, %s10
      %p211 = scmp.lt.s32.totalorder %s10, 3
      %p212 = pnand %p210, %p211
      %p213 = pneg %p212
      // Predicated region
      $region63: #{tpu_custom_call.1} parent=5 // pred_check
        _
      $region64: #{tpu_custom_call.1} parent=5 // pred_check_branch
        %215 = sbr.rel (%p212) target = $region66
      $region65: #{tpu_custom_call.1} parent=5 // pred_region
        %s216 = ssub.s32 %s10, 1
        %s217 = sand.u32 %s23, 1
        %s218 = sand.u32 %s23, 1
        %s219 = smul.addr %s218, 64
        %s220 = scalar_lea.vmem [#allocation2], %s219
        // Predicated region
        $region67: #{tpu_custom_call.1} parent=65 // pred_check
          %p221 = pneg %p36
        $region68: #{tpu_custom_call.1} parent=65 // pred_check_branch
          %223 = sbr.rel (%p221) target = $region70
        $region69: #{tpu_custom_call.1} parent=65 // pred_region
          _
        $region70: #{tpu_custom_call.1} parent=65 // pred_fallthru
          _
        // Predicated region
        $region71: #{tpu_custom_call.1} parent=65 // pred_check
          %p224 = pneg %p78
        $region72: #{tpu_custom_call.1} parent=65 // pred_check_branch
          %226 = sbr.rel (%p224) target = $region74
        $region73: #{tpu_custom_call.1} parent=65 // pred_region
          %228 = dma.done [#allocation4], 3584
        $region74: #{tpu_custom_call.1} parent=65 // pred_fallthru
          _
        %s229 = sand.u32 %s23, 1
        %s230 = sand.u32 %s23, 1
        %s231 = smul.addr %s230, 64
        %s232 = scalar_lea.vmem [#allocation2], %s231
        %p233 = pneg %p36
        %p234 = pneg %p33
        %p235 = pneg %p57
        %p236 = pneg %p54
        %p237 = pneg %p78
        %p238 = pneg %p75
        %p239 = pneg %p104
        %p240 = pneg %p101
        %p241 = scmp.lt.s32.totalorder %s15, 1
        %s242 = scalar_select %p241, %s15, 1
        %s243 = smul.addr %s242, 8
        %s244 = scalar_lea.vmem %s3, %s243
        %p245 = scmp.lt.s32.totalorder %s15, 1
        %s246 = scalar_select %p245, %s15, 1
        %s247 = smul.addr %s246, 8
        %s248 = scalar_lea.vmem %s3, %s247
        %v249 = vld [vmem:[%s1] sm:$0xff]
        %v250 = vld [vmem:[%s1 + $0x8] sm:$0xff]
        %v251 = vld [vmem:[%s1 + $0x10] sm:$0xff]
        %v252 = vld [vmem:[%s1 + $0x18] sm:$0xff]
        %v253 = vld [vmem:[%s1 + $0x20] sm:$0xff]
        %v254 = vld [vmem:[%s1 + $0x28] sm:$0x1]
        %v255 = vld [vmem:[%s220] sm:$0xff]
        %v256 = vld [vmem:[%s220 + $0x8] sm:$0xff]
        %v257 = vld [vmem:[%s220 + $0x10] sm:$0xff]
        %v258 = vld [vmem:[%s220 + $0x18] sm:$0xff]
        %v259 = vld [vmem:[%s220 + $0x20] sm:$0xff]
        %v260 = vld [vmem:[%s220 + $0x28] sm:$0xff]
        %v261 = vld [vmem:[%s220 + $0x30] sm:$0xff]
        %v262 = vld [vmem:[%s220 + $0x38] sm:$0xff]
        %v263 = vperm.slane %v254, 0
        %vm264 = vcmask 64512
        %v266 = vsel %vm264, %v255, 0
        %v269 = vsel %vm264, %v256, 0
        %v272 = vsel %vm264, %v257, 0
        %v275 = vsel %vm264, %v258, 0
        %v278 = vsel %vm264, %v259, 0
        %v281 = vsel %vm264, %v260, 0
        %v284 = vsel %vm264, %v261, 0
        %v287 = vsel %vm264, %v262, 0
        %289 = vmatpush.msra.mxu0 0.0
        %290 = vmatpush.msra.mxu0 0.0
        %291 = vmatpush.msra.mxu0 0.0
        %292 = vmatpush.msra.mxu0 0.0
        %293 = vmatpush.msra.mxu0 0.0
        %294 = vmatpush.msra.mxu0 0.0
        %295 = vmatpush.msra.mxu0 0.0
        %296 = vmatpush.msra.mxu0 0.0
        %297 = vmatpush.msra.mxu0 0.0
        %298 = vmatpush.msra.mxu0 0.0
        %299 = vmatpush.msra.mxu0 0.0
        %300 = vmatpush.msra.mxu0 0.0
        %301 = vmatpush.msra.mxu0 0.0
        %302 = vmatpush.msra.mxu0 0.0
        %303 = vmatpush.msra.mxu0 0.0
        %304 = vmatpush.msra.mxu0 %v249
        %305 = vmatmul.f32.gmra.mxu0 %v266
        %v306 = vpop.f32.mrf.mxu0
        %v307 = vadd.f32 %v263, %v306
        %308 = vmatmul.f32.gmra.mxu0 %v269
        %v309 = vpop.f32.mrf.mxu0
        %v310 = vadd.f32 %v263, %v309
        %311 = vmatmul.f32.gmra.mxu0 %v272
        %v312 = vpop.f32.mrf.mxu0
        %v313 = vadd.f32 %v263, %v312
        %314 = vmatmul.f32.gmra.mxu0 %v275
        %v315 = vpop.f32.mrf.mxu0
        %v316 = vadd.f32 %v263, %v315
        %317 = vmatmul.f32.gmra.mxu0 %v278
        %v318 = vpop.f32.mrf.mxu0
        %v319 = vadd.f32 %v263, %v318
        %320 = vmatmul.f32.gmra.mxu0 %v281
        %v321 = vpop.f32.mrf.mxu0
        %v322 = vadd.f32 %v263, %v321
        %323 = vmatmul.f32.gmra.mxu0 %v284
        %v324 = vpop.f32.mrf.mxu0
        %v325 = vadd.f32 %v263, %v324
        %326 = vmatmul.f32.gmra.mxu0 %v287
        %v327 = vpop.f32.mrf.mxu0
        %v328 = vadd.f32 %v263, %v327
        %329 = vdwg.mxu0
        %vm330 = vcmask 261120
        %v332 = vsel %vm330, 0.0, 0
        %334 = vmatpush.msra.mxu0 0.0
        %335 = vmatpush.msra.mxu0 0.0
        %336 = vmatpush.msra.mxu0 0.0
        %337 = vmatpush.msra.mxu0 0.0
        %338 = vmatpush.msra.mxu0 0.0
        %339 = vmatpush.msra.mxu0 0.0
        %340 = vmatpush.msra.mxu0 0.0
        %341 = vmatpush.msra.mxu0 0.0
        %342 = vmatpush.msra.mxu0 0.0
        %343 = vmatpush.msra.mxu0 0.0
        %344 = vmatpush.msra.mxu0 0.0
        %345 = vmatpush.msra.mxu0 0.0
        %346 = vmatpush.msra.mxu0 %v253
        %347 = vmatpush.msra.mxu0 %v252
        %348 = vmatpush.msra.mxu0 %v251
        %349 = vmatpush.msra.mxu0 %v250
        %350 = vmatmul.f32.gmra.mxu0 %v332
        %v351 = vpop.f32.mrf.mxu0
        %v352 = vadd.f32 0.0, %v351
        %353 = vdwg.mxu0
        %v354 = vadd.f32 %v307, %v352
        %v355 = vxor.u32 %v354, 2147483648
        %v356 = vmul.f32 %v355, 1.442695
        %v357 = vpow.pop %v356
        %v358 = vadd.f32 %v357, 1.0
        %v359 = vrcp.pop %v358
        %v360 = vmul.f32 %v358, %v359
        %v361 = vsub.f32 1.0, %v360
        %v362 = vmul.f32 %v359, %v361
        %v363 = vadd.f32 %v359, %v362
        %vm364 = vweird.f32 %v358
        %vm365 = vweird.f32 %v359
        %vm366 = vmor %vm364, %vm365
        %v367 = vsel %vm366, %v359, %v363
        %v368 = vand.u32 2147483647, %v358
        %vm369 = vcmp.eq.f32.partialorder %v368, 8.507059e+37
        %v370 = vand.u32 %v358, 2147483648
        %v371 = vor.u32 1.1754944e-38, %v370
        %v372 = vsel %vm369, %v371, %v367
        %v373 = vmul.f32 1.0, %v372
        %v374 = vtanh.pop %v354
        %v375 = vmul.f32 %v373, 0.0
        %377 = vrot.lane.b32.xlu0 %v374, 64
        %v378 = vpop.permute.xlu0 %377
        %v380 = vmul.f32 %v373, %v378
        %382 = vrot.lane.b32.xlu0 %v380, 32
        %v383 = vpop.permute.xlu0 %382
        %v385 = vadd.f32 %v375, %v383
        %v386 = vtanh.pop %v385
        %388 = vrot.lane.b32.xlu0 %v386, 64
        %v389 = vpop.permute.xlu0 %388
        %v391 = vmul.f32 %v373, %v389
        %393 = vrot.lane.b32.xlu0 %v391, 32
        %v394 = vpop.permute.xlu0 %393
        %v395 = vsel %vm330, %v394, 0
        %397 = vmatpush.msra.mxu0 0.0
        %398 = vmatpush.msra.mxu0 0.0
        %399 = vmatpush.msra.mxu0 0.0
        %400 = vmatpush.msra.mxu0 0.0
        %401 = vmatpush.msra.mxu0 0.0
        %402 = vmatpush.msra.mxu0 0.0
        %403 = vmatpush.msra.mxu0 0.0
        %404 = vmatpush.msra.mxu0 0.0
        %405 = vmatpush.msra.mxu0 0.0
        %406 = vmatpush.msra.mxu0 0.0
        %407 = vmatpush.msra.mxu0 0.0
        %408 = vmatpush.msra.mxu0 0.0
        %409 = vmatpush.msra.mxu0 %v253
        %410 = vmatpush.msra.mxu0 %v252
        %411 = vmatpush.msra.mxu0 %v251
        %412 = vmatpush.msra.mxu0 %v250
        %413 = vmatmul.f32.gmra.mxu0 %v395
        %v414 = vpop.f32.mrf.mxu0
        %v415 = vadd.f32 0.0, %v414
        %416 = vdwg.mxu0
        %v417 = vadd.f32 %v310, %v415
        %v418 = vxor.u32 %v417, 2147483648
        %v419 = vmul.f32 %v418, 1.442695
        %v420 = vpow.pop %v419
        %v421 = vadd.f32 %v420, 1.0
        %v422 = vrcp.pop %v421
        %v423 = vmul.f32 %v421, %v422
        %v424 = vsub.f32 1.0, %v423
        %v425 = vmul.f32 %v422, %v424
        %v426 = vadd.f32 %v422, %v425
        %vm427 = vweird.f32 %v421
        %vm428 = vweird.f32 %v422
        %vm429 = vmor %vm427, %vm428
        %v430 = vsel %vm429, %v422, %v426
        %v431 = vand.u32 2147483647, %v421
        %vm432 = vcmp.eq.f32.partialorder %v431, 8.507059e+37
        %v433 = vand.u32 %v421, 2147483648
        %v434 = vor.u32 1.1754944e-38, %v433
        %v435 = vsel %vm432, %v434, %v430
        %v436 = vmul.f32 1.0, %v435
        %v437 = vtanh.pop %v417
        %v438 = vmul.f32 %v436, %v385
        %440 = vrot.lane.b32.xlu0 %v437, 64
        %v441 = vpop.permute.xlu0 %440
        %v443 = vmul.f32 %v436, %v441
        %445 = vrot.lane.b32.xlu0 %v443, 32
        %v446 = vpop.permute.xlu0 %445
        %v448 = vadd.f32 %v438, %v446
        %v449 = vtanh.pop %v448
        %451 = vrot.lane.b32.xlu0 %v449, 64
        %v452 = vpop.permute.xlu0 %451
        %v454 = vmul.f32 %v436, %v452
        %456 = vrot.lane.b32.xlu0 %v454, 32
        %v457 = vpop.permute.xlu0 %456
        %v458 = vsel %vm330, %v457, 0
        %460 = vmatpush.msra.mxu0 0.0
        %461 = vmatpush.msra.mxu0 0.0
        %462 = vmatpush.msra.mxu0 0.0
        %463 = vmatpush.msra.mxu0 0.0
        %464 = vmatpush.msra.mxu0 0.0
        %465 = vmatpush.msra.mxu0 0.0
        %466 = vmatpush.msra.mxu0 0.0
        %467 = vmatpush.msra.mxu0 0.0
        %468 = vmatpush.msra.mxu0 0.0
        %469 = vmatpush.msra.mxu0 0.0
        %470 = vmatpush.msra.mxu0 0.0
        %471 = vmatpush.msra.mxu0 0.0
        %472 = vmatpush.msra.mxu0 %v253
        %473 = vmatpush.msra.mxu0 %v252
        %474 = vmatpush.msra.mxu0 %v251
        %475 = vmatpush.msra.mxu0 %v250
        %476 = vmatmul.f32.gmra.mxu0 %v458
        %v477 = vpop.f32.mrf.mxu0
        %v478 = vadd.f32 0.0, %v477
        %479 = vdwg.mxu0
        %v480 = vadd.f32 %v313, %v478
        %v481 = vxor.u32 %v480, 2147483648
        %v482 = vmul.f32 %v481, 1.442695
        %v483 = vpow.pop %v482
        %v484 = vadd.f32 %v483, 1.0
        %v485 = vrcp.pop %v484
        %v486 = vmul.f32 %v484, %v485
        %v487 = vsub.f32 1.0, %v486
        %v488 = vmul.f32 %v485, %v487
        %v489 = vadd.f32 %v485, %v488
        %vm490 = vweird.f32 %v484
        %vm491 = vweird.f32 %v485
        %vm492 = vmor %vm490, %vm491
        %v493 = vsel %vm492, %v485, %v489
        %v494 = vand.u32 2147483647, %v484
        %vm495 = vcmp.eq.f32.partialorder %v494, 8.507059e+37
        %v496 = vand.u32 %v484, 2147483648
        %v497 = vor.u32 1.1754944e-38, %v496
        %v498 = vsel %vm495, %v497, %v493
        %v499 = vmul.f32 1.0, %v498
        %v500 = vtanh.pop %v480
        %v501 = vmul.f32 %v499, %v448
        %503 = vrot.lane.b32.xlu0 %v500, 64
        %v504 = vpop.permute.xlu0 %503
        %v506 = vmul.f32 %v499, %v504
        %508 = vrot.lane.b32.xlu0 %v506, 32
        %v509 = vpop.permute.xlu0 %508
        %v511 = vadd.f32 %v501, %v509
        %v512 = vtanh.pop %v511
        %514 = vrot.lane.b32.xlu0 %v512, 64
        %v515 = vpop.permute.xlu0 %514
        %v517 = vmul.f32 %v499, %v515
        %519 = vrot.lane.b32.xlu0 %v517, 32
        %v520 = vpop.permute.xlu0 %519
        %v521 = vsel %vm330, %v520, 0
        %523 = vmatpush.msra.mxu0 0.0
        %524 = vmatpush.msra.mxu0 0.0
        %525 = vmatpush.msra.mxu0 0.0
        %526 = vmatpush.msra.mxu0 0.0
        %527 = vmatpush.msra.mxu0 0.0
        %528 = vmatpush.msra.mxu0 0.0
        %529 = vmatpush.msra.mxu0 0.0
        %530 = vmatpush.msra.mxu0 0.0
        %531 = vmatpush.msra.mxu0 0.0
        %532 = vmatpush.msra.mxu0 0.0
        %533 = vmatpush.msra.mxu0 0.0
        %534 = vmatpush.msra.mxu0 0.0
        %535 = vmatpush.msra.mxu0 %v253
        %536 = vmatpush.msra.mxu0 %v252
        %537 = vmatpush.msra.mxu0 %v251
        %538 = vmatpush.msra.mxu0 %v250
        %539 = vmatmul.f32.gmra.mxu0 %v521
        %v540 = vpop.f32.mrf.mxu0
        %v541 = vadd.f32 0.0, %v540
        %542 = vdwg.mxu0
        %v543 = vadd.f32 %v316, %v541
        %v544 = vxor.u32 %v543, 2147483648
        %v545 = vmul.f32 %v544, 1.442695
        %v546 = vpow.pop %v545
        %v547 = vadd.f32 %v546, 1.0
        %v548 = vrcp.pop %v547
        %v549 = vmul.f32 %v547, %v548
        %v550 = vsub.f32 1.0, %v549
        %v551 = vmul.f32 %v548, %v550
        %v552 = vadd.f32 %v548, %v551
        %vm553 = vweird.f32 %v547
        %vm554 = vweird.f32 %v548
        %vm555 = vmor %vm553, %vm554
        %v556 = vsel %vm555, %v548, %v552
        %v557 = vand.u32 2147483647, %v547
        %vm558 = vcmp.eq.f32.partialorder %v557, 8.507059e+37
        %v559 = vand.u32 %v547, 2147483648
        %v560 = vor.u32 1.1754944e-38, %v559
        %v561 = vsel %vm558, %v560, %v556
        %v562 = vmul.f32 1.0, %v561
        %v563 = vtanh.pop %v543
        %v564 = vmul.f32 %v562, %v511
        %566 = vrot.lane.b32.xlu0 %v563, 64
        %v567 = vpop.permute.xlu0 %566
        %v569 = vmul.f32 %v562, %v567
        %571 = vrot.lane.b32.xlu0 %v569, 32
        %v572 = vpop.permute.xlu0 %571
        %v574 = vadd.f32 %v564, %v572
        %v575 = vtanh.pop %v574
        %577 = vrot.lane.b32.xlu0 %v575, 64
        %v578 = vpop.permute.xlu0 %577
        %v580 = vmul.f32 %v562, %v578
        %582 = vrot.lane.b32.xlu0 %v580, 32
        %v583 = vpop.permute.xlu0 %582
        %v584 = vsel %vm330, %v583, 0
        %586 = vmatpush.msra.mxu0 0.0
        %587 = vmatpush.msra.mxu0 0.0
        %588 = vmatpush.msra.mxu0 0.0
        %589 = vmatpush.msra.mxu0 0.0
        %590 = vmatpush.msra.mxu0 0.0
        %591 = vmatpush.msra.mxu0 0.0
        %592 = vmatpush.msra.mxu0 0.0
        %593 = vmatpush.msra.mxu0 0.0
        %594 = vmatpush.msra.mxu0 0.0
        %595 = vmatpush.msra.mxu0 0.0
        %596 = vmatpush.msra.mxu0 0.0
        %597 = vmatpush.msra.mxu0 0.0
        %598 = vmatpush.msra.mxu0 %v253
        %599 = vmatpush.msra.mxu0 %v252
        %600 = vmatpush.msra.mxu0 %v251
        %601 = vmatpush.msra.mxu0 %v250
        %602 = vmatmul.f32.gmra.mxu0 %v584
        %v603 = vpop.f32.mrf.mxu0
        %v604 = vadd.f32 0.0, %v603
        %605 = vdwg.mxu0
        %v606 = vadd.f32 %v319, %v604
        %v607 = vxor.u32 %v606, 2147483648
        %v608 = vmul.f32 %v607, 1.442695
        %v609 = vpow.pop %v608
        %v610 = vadd.f32 %v609, 1.0
        %v611 = vrcp.pop %v610
        %v612 = vmul.f32 %v610, %v611
        %v613 = vsub.f32 1.0, %v612
        %v614 = vmul.f32 %v611, %v613
        %v615 = vadd.f32 %v611, %v614
        %vm616 = vweird.f32 %v610
        %vm617 = vweird.f32 %v611
        %vm618 = vmor %vm616, %vm617
        %v619 = vsel %vm618, %v611, %v615
        %v620 = vand.u32 2147483647, %v610
        %vm621 = vcmp.eq.f32.partialorder %v620, 8.507059e+37
        %v622 = vand.u32 %v610, 2147483648
        %v623 = vor.u32 1.1754944e-38, %v622
        %v624 = vsel %vm621, %v623, %v619
        %v625 = vmul.f32 1.0, %v624
        %v626 = vtanh.pop %v606
        %v627 = vmul.f32 %v625, %v574
        %629 = vrot.lane.b32.xlu0 %v626, 64
        %v630 = vpop.permute.xlu0 %629
        %v632 = vmul.f32 %v625, %v630
        %634 = vrot.lane.b32.xlu0 %v632, 32
        %v635 = vpop.permute.xlu0 %634
        %v637 = vadd.f32 %v627, %v635
        %v638 = vtanh.pop %v637
        %640 = vrot.lane.b32.xlu0 %v638, 64
        %v641 = vpop.permute.xlu0 %640
        %v643 = vmul.f32 %v625, %v641
        %645 = vrot.lane.b32.xlu0 %v643, 32
        %v646 = vpop.permute.xlu0 %645
        %v647 = vsel %vm330, %v646, 0
        %649 = vmatpush.msra.mxu0 0.0
        %650 = vmatpush.msra.mxu0 0.0
        %651 = vmatpush.msra.mxu0 0.0
        %652 = vmatpush.msra.mxu0 0.0
        %653 = vmatpush.msra.mxu0 0.0
        %654 = vmatpush.msra.mxu0 0.0
        %655 = vmatpush.msra.mxu0 0.0
        %656 = vmatpush.msra.mxu0 0.0
        %657 = vmatpush.msra.mxu0 0.0
        %658 = vmatpush.msra.mxu0 0.0
        %659 = vmatpush.msra.mxu0 0.0
        %660 = vmatpush.msra.mxu0 0.0
        %661 = vmatpush.msra.mxu0 %v253
        %662 = vmatpush.msra.mxu0 %v252
        %663 = vmatpush.msra.mxu0 %v251
        %664 = vmatpush.msra.mxu0 %v250
        %665 = vmatmul.f32.gmra.mxu0 %v647
        %v666 = vpop.f32.mrf.mxu0
        %v667 = vadd.f32 0.0, %v666
        %668 = vdwg.mxu0
        %v669 = vadd.f32 %v322, %v667
        %v670 = vxor.u32 %v669, 2147483648
        %v671 = vmul.f32 %v670, 1.442695
        %v672 = vpow.pop %v671
        %v673 = vadd.f32 %v672, 1.0
        %v674 = vrcp.pop %v673
        %v675 = vmul.f32 %v673, %v674
        %v676 = vsub.f32 1.0, %v675
        %v677 = vmul.f32 %v674, %v676
        %v678 = vadd.f32 %v674, %v677
        %vm679 = vweird.f32 %v673
        %vm680 = vweird.f32 %v674
        %vm681 = vmor %vm679, %vm680
        %v682 = vsel %vm681, %v674, %v678
        %v683 = vand.u32 2147483647, %v673
        %vm684 = vcmp.eq.f32.partialorder %v683, 8.507059e+37
        %v685 = vand.u32 %v673, 2147483648
        %v686 = vor.u32 1.1754944e-38, %v685
        %v687 = vsel %vm684, %v686, %v682
        %v688 = vmul.f32 1.0, %v687
        %v689 = vtanh.pop %v669
        %v690 = vmul.f32 %v688, %v637
        %692 = vrot.lane.b32.xlu0 %v689, 64
        %v693 = vpop.permute.xlu0 %692
        %v695 = vmul.f32 %v688, %v693
        %697 = vrot.lane.b32.xlu0 %v695, 32
        %v698 = vpop.permute.xlu0 %697
        %v700 = vadd.f32 %v690, %v698
        %v701 = vtanh.pop %v700
        %703 = vrot.lane.b32.xlu0 %v701, 64
        %v704 = vpop.permute.xlu0 %703
        %v706 = vmul.f32 %v688, %v704
        %708 = vrot.lane.b32.xlu0 %v706, 32
        %v709 = vpop.permute.xlu0 %708
        %v710 = vsel %vm330, %v709, 0
        %712 = vmatpush.msra.mxu0 0.0
        %713 = vmatpush.msra.mxu0 0.0
        %714 = vmatpush.msra.mxu0 0.0
        %715 = vmatpush.msra.mxu0 0.0
        %716 = vmatpush.msra.mxu0 0.0
        %717 = vmatpush.msra.mxu0 0.0
        %718 = vmatpush.msra.mxu0 0.0
        %719 = vmatpush.msra.mxu0 0.0
        %720 = vmatpush.msra.mxu0 0.0
        %721 = vmatpush.msra.mxu0 0.0
        %722 = vmatpush.msra.mxu0 0.0
        %723 = vmatpush.msra.mxu0 0.0
        %724 = vmatpush.msra.mxu0 %v253
        %725 = vmatpush.msra.mxu0 %v252
        %726 = vmatpush.msra.mxu0 %v251
        %727 = vmatpush.msra.mxu0 %v250
        %728 = vmatmul.f32.gmra.mxu0 %v710
        %v729 = vpop.f32.mrf.mxu0
        %v730 = vadd.f32 0.0, %v729
        %731 = vdwg.mxu0
        %v732 = vadd.f32 %v325, %v730
        %v733 = vxor.u32 %v732, 2147483648
        %v734 = vmul.f32 %v733, 1.442695
        %v735 = vpow.pop %v734
        %v736 = vadd.f32 %v735, 1.0
        %v737 = vrcp.pop %v736
        %v738 = vmul.f32 %v736, %v737
        %v739 = vsub.f32 1.0, %v738
        %v740 = vmul.f32 %v737, %v739
        %v741 = vadd.f32 %v737, %v740
        %vm742 = vweird.f32 %v736
        %vm743 = vweird.f32 %v737
        %vm744 = vmor %vm742, %vm743
        %v745 = vsel %vm744, %v737, %v741
        %v746 = vand.u32 2147483647, %v736
        %vm747 = vcmp.eq.f32.partialorder %v746, 8.507059e+37
        %v748 = vand.u32 %v736, 2147483648
        %v749 = vor.u32 1.1754944e-38, %v748
        %v750 = vsel %vm747, %v749, %v745
        %v751 = vmul.f32 1.0, %v750
        %v752 = vtanh.pop %v732
        %v753 = vmul.f32 %v751, %v700
        %755 = vrot.lane.b32.xlu0 %v752, 64
        %v756 = vpop.permute.xlu0 %755
        %v758 = vmul.f32 %v751, %v756
        %760 = vrot.lane.b32.xlu0 %v758, 32
        %v761 = vpop.permute.xlu0 %760
        %v763 = vadd.f32 %v753, %v761
        %v764 = vtanh.pop %v763
        %766 = vrot.lane.b32.xlu0 %v764, 64
        %v767 = vpop.permute.xlu0 %766
        %v769 = vmul.f32 %v751, %v767
        %771 = vrot.lane.b32.xlu0 %v769, 32
        %v772 = vpop.permute.xlu0 %771
        %v773 = vsel %vm330, %v772, 0
        %775 = vmatpush.msra.mxu0 0.0
        %776 = vmatpush.msra.mxu0 0.0
        %777 = vmatpush.msra.mxu0 0.0
        %778 = vmatpush.msra.mxu0 0.0
        %779 = vmatpush.msra.mxu0 0.0
        %780 = vmatpush.msra.mxu0 0.0
        %781 = vmatpush.msra.mxu0 0.0
        %782 = vmatpush.msra.mxu0 0.0
        %783 = vmatpush.msra.mxu0 0.0
        %784 = vmatpush.msra.mxu0 0.0
        %785 = vmatpush.msra.mxu0 0.0
        %786 = vmatpush.msra.mxu0 0.0
        %787 = vmatpush.msra.mxu0 %v253
        %788 = vmatpush.msra.mxu0 %v252
        %789 = vmatpush.msra.mxu0 %v251
        %790 = vmatpush.msra.mxu0 %v250
        %791 = vmatmul.f32.gmra.mxu0 %v773
        %v792 = vpop.f32.mrf.mxu0
        %v793 = vadd.f32 0.0, %v792
        %794 = vdwg.mxu0
        %v795 = vadd.f32 %v328, %v793
        %v796 = vxor.u32 %v795, 2147483648
        %v797 = vmul.f32 %v796, 1.442695
        %v798 = vpow.pop %v797
        %v799 = vadd.f32 %v798, 1.0
        %v800 = vrcp.pop %v799
        %v801 = vmul.f32 %v799, %v800
        %v802 = vsub.f32 1.0, %v801
        %v803 = vmul.f32 %v800, %v802
        %v804 = vadd.f32 %v800, %v803
        %vm805 = vweird.f32 %v799
        %vm806 = vweird.f32 %v800
        %vm807 = vmor %vm805, %vm806
        %v808 = vsel %vm807, %v800, %v804
        %v809 = vand.u32 2147483647, %v799
        %vm810 = vcmp.eq.f32.partialorder %v809, 8.507059e+37
        %v811 = vand.u32 %v799, 2147483648
        %v812 = vor.u32 1.1754944e-38, %v811
        %v813 = vsel %vm810, %v812, %v808
        %v814 = vmul.f32 1.0, %v813
        %v815 = vtanh.pop %v795
        %v816 = vmul.f32 %v814, %v763
        %818 = vrot.lane.b32.xlu0 %v815, 64
        %v819 = vpop.permute.xlu0 %818
        %v821 = vmul.f32 %v814, %v819
        %823 = vrot.lane.b32.xlu0 %v821, 32
        %v824 = vpop.permute.xlu0 %823
        %v826 = vadd.f32 %v816, %v824
        %v827 = vtanh.pop %v826
        %829 = vrot.lane.b32.xlu0 %v827, 64
        %v830 = vpop.permute.xlu0 %829
        %v832 = vmul.f32 %v814, %v830
        %v833 = vld [vmem:[#allocation3] sm:$0xff]
        %v834 = vld [vmem:[#allocation3 + $0x8] sm:$0xff]
        %v835 = vld [vmem:[#allocation3 + $0x10] sm:$0xff]
        %v836 = vld [vmem:[#allocation3 + $0x18] sm:$0xff]
        %v837 = vld [vmem:[#allocation3 + $0x20] sm:$0xff]
        %v838 = vld [vmem:[#allocation3 + $0x28] sm:$0xff]
        %v839 = vld [vmem:[#allocation3 + $0x30] sm:$0xff]
        %v840 = vld [vmem:[#allocation3 + $0x38] sm:$0xff]
        %v841 = vld [vmem:[#allocation3 + $0x40] sm:$0xff]
        %v842 = vld [vmem:[#allocation3 + $0x48] sm:$0xff]
        %v843 = vld [vmem:[#allocation3 + $0x50] sm:$0xff]
        %v844 = vld [vmem:[#allocation3 + $0x58] sm:$0xff]
        %v845 = vld [vmem:[#allocation3 + $0x60] sm:$0xff]
        %v846 = vld [vmem:[#allocation3 + $0x68] sm:$0xff]
        %v847 = vld [vmem:[#allocation3 + $0x70] sm:$0xff]
        %v848 = vld [vmem:[#allocation3 + $0x78] sm:$0xff]
        %v849 = vld [vmem:[#allocation3 + $0x80] sm:$0xff]
        %v850 = vld [vmem:[#allocation3 + $0x88] sm:$0xff]
        %v851 = vld [vmem:[#allocation3 + $0x90] sm:$0xff]
        %v852 = vld [vmem:[#allocation3 + $0x98] sm:$0xff]
        %v853 = vld [vmem:[#allocation3 + $0xa0] sm:$0xff]
        %v854 = vld [vmem:[#allocation3 + $0xa8] sm:$0xff]
        %v855 = vld [vmem:[#allocation3 + $0xb0] sm:$0xff]
        %v856 = vld [vmem:[#allocation3 + $0xb8] sm:$0xff]
        %s857 = scalar_lea.vmem [#allocation3], 192
        %v858 = vld [vmem:[%s857] ss:$8 sm:$0x3]
        %s859 = scalar_lea.vmem [#allocation3], 208
        %v860 = vld [vmem:[%s859] ss:$8 sm:$0x3]
        %v862 = vperm.slane %v858, 0
        %v863 = vperm.slane %v858, 1
        %867 = vrot.lane.b32.xlu0 %v832, 32
        %v868 = vpop.permute.xlu0 %867
        %v869 = vsel %vm330, %v868, 0
        %871 = vmatpush.msra.mxu0 0.0
        %872 = vmatpush.msra.mxu0 0.0
        %873 = vmatpush.msra.mxu0 0.0
        %874 = vmatpush.msra.mxu0 0.0
        %875 = vmatpush.msra.mxu0 0.0
        %876 = vmatpush.msra.mxu0 0.0
        %877 = vmatpush.msra.mxu0 0.0
        %878 = vmatpush.msra.mxu0 0.0
        %879 = vmatpush.msra.mxu0 0.0
        %880 = vmatpush.msra.mxu0 0.0
        %881 = vmatpush.msra.mxu0 0.0
        %882 = vmatpush.msra.mxu0 0.0
        %883 = vmatpush.msra.mxu0 %v839
        %884 = vmatpush.msra.mxu0 %v837
        %885 = vmatpush.msra.mxu0 %v835
        %886 = vmatpush.msra.mxu0 %v833
        %887 = vmatmul.f32.gmra.mxu0 %v869
        %v888 = vpop.f32.mrf.mxu0
        %v889 = vadd.f32 %v862, %v888
        %890 = vdwg.mxu0
        %891 = vmatpush.msra.mxu0 0.0
        %892 = vmatpush.msra.mxu0 0.0
        %893 = vmatpush.msra.mxu0 0.0
        %894 = vmatpush.msra.mxu0 0.0
        %895 = vmatpush.msra.mxu0 0.0
        %896 = vmatpush.msra.mxu0 0.0
        %897 = vmatpush.msra.mxu0 0.0
        %898 = vmatpush.msra.mxu0 0.0
        %899 = vmatpush.msra.mxu0 0.0
        %900 = vmatpush.msra.mxu0 0.0
        %901 = vmatpush.msra.mxu0 0.0
        %902 = vmatpush.msra.mxu0 0.0
        %903 = vmatpush.msra.mxu0 %v840
        %904 = vmatpush.msra.mxu0 %v838
        %905 = vmatpush.msra.mxu0 %v836
        %906 = vmatpush.msra.mxu0 %v834
        %907 = vmatmul.f32.gmra.mxu0 %v869
        %v908 = vpop.f32.mrf.mxu0
        %v909 = vadd.f32 %v863, %v908
        %910 = vdwg.mxu0
        %vm911 = vcmask 523264
        %v912 = vsel %vm911, 0.0, 0
        %914 = vmatpush.msra.mxu0 0.0
        %915 = vmatpush.msra.mxu0 0.0
        %916 = vmatpush.msra.mxu0 0.0
        %917 = vmatpush.msra.mxu0 0.0
        %918 = vmatpush.msra.mxu0 0.0
        %919 = vmatpush.msra.mxu0 0.0
        %920 = vmatpush.msra.mxu0 0.0
        %921 = vmatpush.msra.mxu0 0.0
        %922 = vmatpush.msra.mxu0 %v855
        %923 = vmatpush.msra.mxu0 %v853
        %924 = vmatpush.msra.mxu0 %v851
        %925 = vmatpush.msra.mxu0 %v849
        %926 = vmatpush.msra.mxu0 %v847
        %927 = vmatpush.msra.mxu0 %v845
        %928 = vmatpush.msra.mxu0 %v843
        %929 = vmatpush.msra.mxu0 %v841
        %930 = vmatmul.f32.gmra.mxu0 %v912
        %v931 = vpop.f32.mrf.mxu0
        %v932 = vadd.f32 0.0, %v931
        %933 = vdwg.mxu0
        %934 = vmatpush.msra.mxu0 0.0
        %935 = vmatpush.msra.mxu0 0.0
        %936 = vmatpush.msra.mxu0 0.0
        %937 = vmatpush.msra.mxu0 0.0
        %938 = vmatpush.msra.mxu0 0.0
        %939 = vmatpush.msra.mxu0 0.0
        %940 = vmatpush.msra.mxu0 0.0
        %941 = vmatpush.msra.mxu0 0.0
        %942 = vmatpush.msra.mxu0 %v856
        %943 = vmatpush.msra.mxu0 %v854
        %944 = vmatpush.msra.mxu0 %v852
        %945 = vmatpush.msra.mxu0 %v850
        %946 = vmatpush.msra.mxu0 %v848
        %947 = vmatpush.msra.mxu0 %v846
        %948 = vmatpush.msra.mxu0 %v844
        %949 = vmatpush.msra.mxu0 %v842
        %950 = vmatmul.f32.gmra.mxu0 %v912
        %v951 = vpop.f32.mrf.mxu0
        %v952 = vadd.f32 0.0, %v951
        %953 = vdwg.mxu0
        %v954 = vadd.f32 %v889, %v932
        %v955 = vadd.f32 %v909, %v952
        %v956 = vxor.u32 %v954, 2147483648
        %v957 = vmul.f32 %v956, 1.442695
        %v958 = vpow.pop %v957
        %v959 = vadd.f32 %v958, 1.0
        %v960 = vrcp.pop %v959
        %v961 = vmul.f32 %v959, %v960
        %v962 = vsub.f32 1.0, %v961
        %v963 = vmul.f32 %v960, %v962
        %v964 = vadd.f32 %v960, %v963
        %vm965 = vweird.f32 %v959
        %vm966 = vweird.f32 %v960
        %vm967 = vmor %vm965, %vm966
        %v968 = vsel %vm967, %v960, %v964
        %v969 = vand.u32 2147483647, %v959
        %vm970 = vcmp.eq.f32.partialorder %v969, 8.507059e+37
        %v971 = vand.u32 %v959, 2147483648
        %v972 = vor.u32 1.1754944e-38, %v971
        %v973 = vsel %vm970, %v972, %v968
        %v974 = vmul.f32 1.0, %v973
        %v975 = vtanh.pop %v955
        %v976 = vxor.u32 %v955, 2147483648
        %v977 = vmul.f32 %v976, 1.442695
        %v978 = vpow.pop %v977
        %v979 = vadd.f32 %v978, 1.0
        %v980 = vrcp.pop %v979
        %v981 = vmul.f32 %v979, %v980
        %v982 = vsub.f32 1.0, %v981
        %v983 = vmul.f32 %v980, %v982
        %v984 = vadd.f32 %v980, %v983
        %vm985 = vweird.f32 %v979
        %vm986 = vweird.f32 %v980
        %vm987 = vmor %vm985, %vm986
        %v988 = vsel %vm987, %v980, %v984
        %v989 = vand.u32 2147483647, %v979
        %vm990 = vcmp.eq.f32.partialorder %v989, 8.507059e+37
        %v991 = vand.u32 %v979, 2147483648
        %v992 = vor.u32 1.1754944e-38, %v991
        %v993 = vsel %vm990, %v992, %v988
        %v994 = vmul.f32 1.0, %v993
        %v995 = vmul.f32 %v974, 0.0
        %v996 = vmul.f32 %v974, %v975
        %998 = vrot.lane.b32.xlu0 %v996, 64
        %v999 = vpop.permute.xlu0 %998
        %v1001 = vadd.f32 %v995, %v999
        %v1002 = vtanh.pop %v1001
        %v1003 = vmul.f32 %v994, %v1002
        %v1005 = vperm.slane %v860, 0
        %1006 = vrot.lane.b32.xlu0 %v1005, 64
        %v1007 = vpop.permute.xlu0 %1006
        %v1009 = vmul.f32 %v1003, %v1007
        %1011 = vrot.lane.b32.xlu0 %v1009, 64
        %v1012 = vpop.permute.xlu0 %1011
        %v1014 = vsel %vm911, %v1012, 0.0
        %1015 = vadd.xlane.f32.xlu0 %v1014
        %v1016 = vpop.xlane.xlu0 %1015
        %1018 = vrot.lane.b32.xlu0 %v1003, 64
        %v1019 = vpop.permute.xlu0 %1018
        %v1020 = vsel %vm911, %v1019, 0
        %1022 = vmatpush.msra.mxu0 0.0
        %1023 = vmatpush.msra.mxu0 0.0
        %1024 = vmatpush.msra.mxu0 0.0
        %1025 = vmatpush.msra.mxu0 0.0
        %1026 = vmatpush.msra.mxu0 0.0
        %1027 = vmatpush.msra.mxu0 0.0
        %1028 = vmatpush.msra.mxu0 0.0
        %1029 = vmatpush.msra.mxu0 0.0
        %1030 = vmatpush.msra.mxu0 %v855
        %1031 = vmatpush.msra.mxu0 %v853
        %1032 = vmatpush.msra.mxu0 %v851
        %1033 = vmatpush.msra.mxu0 %v849
        %1034 = vmatpush.msra.mxu0 %v847
        %1035 = vmatpush.msra.mxu0 %v845
        %1036 = vmatpush.msra.mxu0 %v843
        %1037 = vmatpush.msra.mxu0 %v841
        %1038 = vmatmul.f32.gmra.mxu0 %v1020
        %v1039 = vpop.f32.mrf.mxu0
        %v1040 = vadd.f32 0.0, %v1039
        %1041 = vdwg.mxu0
        %1042 = vmatpush.msra.mxu0 0.0
        %1043 = vmatpush.msra.mxu0 0.0
        %1044 = vmatpush.msra.mxu0 0.0
        %1045 = vmatpush.msra.mxu0 0.0
        %1046 = vmatpush.msra.mxu0 0.0
        %1047 = vmatpush.msra.mxu0 0.0
        %1048 = vmatpush.msra.mxu0 0.0
        %1049 = vmatpush.msra.mxu0 0.0
        %1050 = vmatpush.msra.mxu0 %v856
        %1051 = vmatpush.msra.mxu0 %v854
        %1052 = vmatpush.msra.mxu0 %v852
        %1053 = vmatpush.msra.mxu0 %v850
        %1054 = vmatpush.msra.mxu0 %v848
        %1055 = vmatpush.msra.mxu0 %v846
        %1056 = vmatpush.msra.mxu0 %v844
        %1057 = vmatpush.msra.mxu0 %v842
        %1058 = vmatmul.f32.gmra.mxu0 %v1020
        %v1059 = vpop.f32.mrf.mxu0
        %v1060 = vadd.f32 0.0, %v1059
        %1061 = vdwg.mxu0
        %v1062 = vadd.f32 %v889, %v1040
        %v1063 = vadd.f32 %v909, %v1060
        %v1064 = vxor.u32 %v1062, 2147483648
        %v1065 = vmul.f32 %v1064, 1.442695
        %v1066 = vpow.pop %v1065
        %v1067 = vadd.f32 %v1066, 1.0
        %v1068 = vrcp.pop %v1067
        %v1069 = vmul.f32 %v1067, %v1068
        %v1070 = vsub.f32 1.0, %v1069
        %v1071 = vmul.f32 %v1068, %v1070
        %v1072 = vadd.f32 %v1068, %v1071
        %vm1073 = vweird.f32 %v1067
        %vm1074 = vweird.f32 %v1068
        %vm1075 = vmor %vm1073, %vm1074
        %v1076 = vsel %vm1075, %v1068, %v1072
        %v1077 = vand.u32 2147483647, %v1067
        %vm1078 = vcmp.eq.f32.partialorder %v1077, 8.507059e+37
        %v1079 = vand.u32 %v1067, 2147483648
        %v1080 = vor.u32 1.1754944e-38, %v1079
        %v1081 = vsel %vm1078, %v1080, %v1076
        %v1082 = vmul.f32 1.0, %v1081
        %v1083 = vtanh.pop %v1063
        %v1084 = vxor.u32 %v1063, 2147483648
        %v1085 = vmul.f32 %v1084, 1.442695
        %v1086 = vpow.pop %v1085
        %v1087 = vadd.f32 %v1086, 1.0
        %v1088 = vrcp.pop %v1087
        %v1089 = vmul.f32 %v1087, %v1088
        %v1090 = vsub.f32 1.0, %v1089
        %v1091 = vmul.f32 %v1088, %v1090
        %v1092 = vadd.f32 %v1088, %v1091
        %vm1093 = vweird.f32 %v1087
        %vm1094 = vweird.f32 %v1088
        %vm1095 = vmor %vm1093, %vm1094
        %v1096 = vsel %vm1095, %v1088, %v1092
        %v1097 = vand.u32 2147483647, %v1087
        %vm1098 = vcmp.eq.f32.partialorder %v1097, 8.507059e+37
        %v1099 = vand.u32 %v1087, 2147483648
        %v1100 = vor.u32 1.1754944e-38, %v1099
        %v1101 = vsel %vm1098, %v1100, %v1096
        %v1102 = vmul.f32 1.0, %v1101
        %v1103 = vmul.f32 %v1082, %v1001
        %v1104 = vmul.f32 %v1082, %v1083
        %1106 = vrot.lane.b32.xlu0 %v1104, 64
        %v1107 = vpop.permute.xlu0 %1106
        %v1109 = vadd.f32 %v1103, %v1107
        %v1110 = vtanh.pop %v1109
        %v1111 = vmul.f32 %v1102, %v1110
        %v1112 = vmul.f32 %v1111, %v1007
        %1114 = vrot.lane.b32.xlu0 %v1112, 64
        %v1115 = vpop.permute.xlu0 %1114
        %v1117 = vsel %vm911, %v1115, 0.0
        %1118 = vadd.xlane.f32.xlu0 %v1117
        %v1119 = vpop.xlane.xlu0 %1118
        %1121 = vrot.lane.b32.xlu0 %v1111, 64
        %v1122 = vpop.permute.xlu0 %1121
        %v1123 = vsel %vm911, %v1122, 0
        %1125 = vmatpush.msra.mxu0 0.0
        %1126 = vmatpush.msra.mxu0 0.0
        %1127 = vmatpush.msra.mxu0 0.0
        %1128 = vmatpush.msra.mxu0 0.0
        %1129 = vmatpush.msra.mxu0 0.0
        %1130 = vmatpush.msra.mxu0 0.0
        %1131 = vmatpush.msra.mxu0 0.0
        %1132 = vmatpush.msra.mxu0 0.0
        %1133 = vmatpush.msra.mxu0 %v855
        %1134 = vmatpush.msra.mxu0 %v853
        %1135 = vmatpush.msra.mxu0 %v851
        %1136 = vmatpush.msra.mxu0 %v849
        %1137 = vmatpush.msra.mxu0 %v847
        %1138 = vmatpush.msra.mxu0 %v845
        %1139 = vmatpush.msra.mxu0 %v843
        %1140 = vmatpush.msra.mxu0 %v841
        %1141 = vmatmul.f32.gmra.mxu0 %v1123
        %v1142 = vpop.f32.mrf.mxu0
        %v1143 = vadd.f32 0.0, %v1142
        %1144 = vdwg.mxu0
        %1145 = vmatpush.msra.mxu0 0.0
        %1146 = vmatpush.msra.mxu0 0.0
        %1147 = vmatpush.msra.mxu0 0.0
        %1148 = vmatpush.msra.mxu0 0.0
        %1149 = vmatpush.msra.mxu0 0.0
        %1150 = vmatpush.msra.mxu0 0.0
        %1151 = vmatpush.msra.mxu0 0.0
        %1152 = vmatpush.msra.mxu0 0.0
        %1153 = vmatpush.msra.mxu0 %v856
        %1154 = vmatpush.msra.mxu0 %v854
        %1155 = vmatpush.msra.mxu0 %v852
        %1156 = vmatpush.msra.mxu0 %v850
        %1157 = vmatpush.msra.mxu0 %v848
        %1158 = vmatpush.msra.mxu0 %v846
        %1159 = vmatpush.msra.mxu0 %v844
        %1160 = vmatpush.msra.mxu0 %v842
        %1161 = vmatmul.f32.gmra.mxu0 %v1123
        %v1162 = vpop.f32.mrf.mxu0
        %v1163 = vadd.f32 0.0, %v1162
        %1164 = vdwg.mxu0
        %v1165 = vadd.f32 %v889, %v1143
        %v1166 = vadd.f32 %v909, %v1163
        %v1167 = vxor.u32 %v1165, 2147483648
        %v1168 = vmul.f32 %v1167, 1.442695
        %v1169 = vpow.pop %v1168
        %v1170 = vadd.f32 %v1169, 1.0
        %v1171 = vrcp.pop %v1170
        %v1172 = vmul.f32 %v1170, %v1171
        %v1173 = vsub.f32 1.0, %v1172
        %v1174 = vmul.f32 %v1171, %v1173
        %v1175 = vadd.f32 %v1171, %v1174
        %vm1176 = vweird.f32 %v1170
        %vm1177 = vweird.f32 %v1171
        %vm1178 = vmor %vm1176, %vm1177
        %v1179 = vsel %vm1178, %v1171, %v1175
        %v1180 = vand.u32 2147483647, %v1170
        %vm1181 = vcmp.eq.f32.partialorder %v1180, 8.507059e+37
        %v1182 = vand.u32 %v1170, 2147483648
        %v1183 = vor.u32 1.1754944e-38, %v1182
        %v1184 = vsel %vm1181, %v1183, %v1179
        %v1185 = vmul.f32 1.0, %v1184
        %v1186 = vtanh.pop %v1166
        %v1187 = vxor.u32 %v1166, 2147483648
        %v1188 = vmul.f32 %v1187, 1.442695
        %v1189 = vpow.pop %v1188
        %v1190 = vadd.f32 %v1189, 1.0
        %v1191 = vrcp.pop %v1190
        %v1192 = vmul.f32 %v1190, %v1191
        %v1193 = vsub.f32 1.0, %v1192
        %v1194 = vmul.f32 %v1191, %v1193
        %v1195 = vadd.f32 %v1191, %v1194
        %vm1196 = vweird.f32 %v1190
        %vm1197 = vweird.f32 %v1191
        %vm1198 = vmor %vm1196, %vm1197
        %v1199 = vsel %vm1198, %v1191, %v1195
        %v1200 = vand.u32 2147483647, %v1190
        %vm1201 = vcmp.eq.f32.partialorder %v1200, 8.507059e+37
        %v1202 = vand.u32 %v1190, 2147483648
        %v1203 = vor.u32 1.1754944e-38, %v1202
        %v1204 = vsel %vm1201, %v1203, %v1199
        %v1205 = vmul.f32 1.0, %v1204
        %v1206 = vmul.f32 %v1185, %v1109
        %v1207 = vmul.f32 %v1185, %v1186
        %1209 = vrot.lane.b32.xlu0 %v1207, 64
        %v1210 = vpop.permute.xlu0 %1209
        %v1212 = vadd.f32 %v1206, %v1210
        %v1213 = vtanh.pop %v1212
        %v1214 = vmul.f32 %v1205, %v1213
        %v1215 = vmul.f32 %v1214, %v1007
        %1217 = vrot.lane.b32.xlu0 %v1215, 64
        %v1218 = vpop.permute.xlu0 %1217
        %v1220 = vsel %vm911, %v1218, 0.0
        %1221 = vadd.xlane.f32.xlu0 %v1220
        %v1222 = vpop.xlane.xlu0 %1221
        %1224 = vrot.lane.b32.xlu0 %v1214, 64
        %v1225 = vpop.permute.xlu0 %1224
        %v1226 = vsel %vm911, %v1225, 0
        %1228 = vmatpush.msra.mxu0 0.0
        %1229 = vmatpush.msra.mxu0 0.0
        %1230 = vmatpush.msra.mxu0 0.0
        %1231 = vmatpush.msra.mxu0 0.0
        %1232 = vmatpush.msra.mxu0 0.0
        %1233 = vmatpush.msra.mxu0 0.0
        %1234 = vmatpush.msra.mxu0 0.0
        %1235 = vmatpush.msra.mxu0 0.0
        %1236 = vmatpush.msra.mxu0 %v855
        %1237 = vmatpush.msra.mxu0 %v853
        %1238 = vmatpush.msra.mxu0 %v851
        %1239 = vmatpush.msra.mxu0 %v849
        %1240 = vmatpush.msra.mxu0 %v847
        %1241 = vmatpush.msra.mxu0 %v845
        %1242 = vmatpush.msra.mxu0 %v843
        %1243 = vmatpush.msra.mxu0 %v841
        %1244 = vmatmul.f32.gmra.mxu0 %v1226
        %v1245 = vpop.f32.mrf.mxu0
        %v1246 = vadd.f32 0.0, %v1245
        %1247 = vdwg.mxu0
        %1248 = vmatpush.msra.mxu0 0.0
        %1249 = vmatpush.msra.mxu0 0.0
        %1250 = vmatpush.msra.mxu0 0.0
        %1251 = vmatpush.msra.mxu0 0.0
        %1252 = vmatpush.msra.mxu0 0.0
        %1253 = vmatpush.msra.mxu0 0.0
        %1254 = vmatpush.msra.mxu0 0.0
        %1255 = vmatpush.msra.mxu0 0.0
        %1256 = vmatpush.msra.mxu0 %v856
        %1257 = vmatpush.msra.mxu0 %v854
        %1258 = vmatpush.msra.mxu0 %v852
        %1259 = vmatpush.msra.mxu0 %v850
        %1260 = vmatpush.msra.mxu0 %v848
        %1261 = vmatpush.msra.mxu0 %v846
        %1262 = vmatpush.msra.mxu0 %v844
        %1263 = vmatpush.msra.mxu0 %v842
        %1264 = vmatmul.f32.gmra.mxu0 %v1226
        %v1265 = vpop.f32.mrf.mxu0
        %v1266 = vadd.f32 0.0, %v1265
        %1267 = vdwg.mxu0
        %v1268 = vadd.f32 %v889, %v1246
        %v1269 = vadd.f32 %v909, %v1266
        %v1270 = vxor.u32 %v1268, 2147483648
        %v1271 = vmul.f32 %v1270, 1.442695
        %v1272 = vpow.pop %v1271
        %v1273 = vadd.f32 %v1272, 1.0
        %v1274 = vrcp.pop %v1273
        %v1275 = vmul.f32 %v1273, %v1274
        %v1276 = vsub.f32 1.0, %v1275
        %v1277 = vmul.f32 %v1274, %v1276
        %v1278 = vadd.f32 %v1274, %v1277
        %vm1279 = vweird.f32 %v1273
        %vm1280 = vweird.f32 %v1274
        %vm1281 = vmor %vm1279, %vm1280
        %v1282 = vsel %vm1281, %v1274, %v1278
        %v1283 = vand.u32 2147483647, %v1273
        %vm1284 = vcmp.eq.f32.partialorder %v1283, 8.507059e+37
        %v1285 = vand.u32 %v1273, 2147483648
        %v1286 = vor.u32 1.1754944e-38, %v1285
        %v1287 = vsel %vm1284, %v1286, %v1282
        %v1288 = vmul.f32 1.0, %v1287
        %v1289 = vtanh.pop %v1269
        %v1290 = vxor.u32 %v1269, 2147483648
        %v1291 = vmul.f32 %v1290, 1.442695
        %v1292 = vpow.pop %v1291
        %v1293 = vadd.f32 %v1292, 1.0
        %v1294 = vrcp.pop %v1293
        %v1295 = vmul.f32 %v1293, %v1294
        %v1296 = vsub.f32 1.0, %v1295
        %v1297 = vmul.f32 %v1294, %v1296
        %v1298 = vadd.f32 %v1294, %v1297
        %vm1299 = vweird.f32 %v1293
        %vm1300 = vweird.f32 %v1294
        %vm1301 = vmor %vm1299, %vm1300
        %v1302 = vsel %vm1301, %v1294, %v1298
        %v1303 = vand.u32 2147483647, %v1293
        %vm1304 = vcmp.eq.f32.partialorder %v1303, 8.507059e+37
        %v1305 = vand.u32 %v1293, 2147483648
        %v1306 = vor.u32 1.1754944e-38, %v1305
        %v1307 = vsel %vm1304, %v1306, %v1302
        %v1308 = vmul.f32 1.0, %v1307
        %v1309 = vmul.f32 %v1288, %v1212
        %v1310 = vmul.f32 %v1288, %v1289
        %1312 = vrot.lane.b32.xlu0 %v1310, 64
        %v1313 = vpop.permute.xlu0 %1312
        %v1315 = vadd.f32 %v1309, %v1313
        %v1316 = vtanh.pop %v1315
        %v1317 = vmul.f32 %v1308, %v1316
        %v1318 = vmul.f32 %v1317, %v1007
        %1320 = vrot.lane.b32.xlu0 %v1318, 64
        %v1321 = vpop.permute.xlu0 %1320
        %v1323 = vsel %vm911, %v1321, 0.0
        %1324 = vadd.xlane.f32.xlu0 %v1323
        %v1325 = vpop.xlane.xlu0 %1324
        %1327 = vrot.lane.b32.xlu0 %v1317, 64
        %v1328 = vpop.permute.xlu0 %1327
        %v1329 = vsel %vm911, %v1328, 0
        %1331 = vmatpush.msra.mxu0 0.0
        %1332 = vmatpush.msra.mxu0 0.0
        %1333 = vmatpush.msra.mxu0 0.0
        %1334 = vmatpush.msra.mxu0 0.0
        %1335 = vmatpush.msra.mxu0 0.0
        %1336 = vmatpush.msra.mxu0 0.0
        %1337 = vmatpush.msra.mxu0 0.0
        %1338 = vmatpush.msra.mxu0 0.0
        %1339 = vmatpush.msra.mxu0 %v855
        %1340 = vmatpush.msra.mxu0 %v853
        %1341 = vmatpush.msra.mxu0 %v851
        %1342 = vmatpush.msra.mxu0 %v849
        %1343 = vmatpush.msra.mxu0 %v847
        %1344 = vmatpush.msra.mxu0 %v845
        %1345 = vmatpush.msra.mxu0 %v843
        %1346 = vmatpush.msra.mxu0 %v841
        %1347 = vmatmul.f32.gmra.mxu0 %v1329
        %v1348 = vpop.f32.mrf.mxu0
        %v1349 = vadd.f32 0.0, %v1348
        %1350 = vdwg.mxu0
        %1351 = vmatpush.msra.mxu0 0.0
        %1352 = vmatpush.msra.mxu0 0.0
        %1353 = vmatpush.msra.mxu0 0.0
        %1354 = vmatpush.msra.mxu0 0.0
        %1355 = vmatpush.msra.mxu0 0.0
        %1356 = vmatpush.msra.mxu0 0.0
        %1357 = vmatpush.msra.mxu0 0.0
        %1358 = vmatpush.msra.mxu0 0.0
        %1359 = vmatpush.msra.mxu0 %v856
        %1360 = vmatpush.msra.mxu0 %v854
        %1361 = vmatpush.msra.mxu0 %v852
        %1362 = vmatpush.msra.mxu0 %v850
        %1363 = vmatpush.msra.mxu0 %v848
        %1364 = vmatpush.msra.mxu0 %v846
        %1365 = vmatpush.msra.mxu0 %v844
        %1366 = vmatpush.msra.mxu0 %v842
        %1367 = vmatmul.f32.gmra.mxu0 %v1329
        %v1368 = vpop.f32.mrf.mxu0
        %v1369 = vadd.f32 0.0, %v1368
        %1370 = vdwg.mxu0
        %v1371 = vadd.f32 %v889, %v1349
        %v1372 = vadd.f32 %v909, %v1369
        %v1373 = vxor.u32 %v1371, 2147483648
        %v1374 = vmul.f32 %v1373, 1.442695
        %v1375 = vpow.pop %v1374
        %v1376 = vadd.f32 %v1375, 1.0
        %v1377 = vrcp.pop %v1376
        %v1378 = vmul.f32 %v1376, %v1377
        %v1379 = vsub.f32 1.0, %v1378
        %v1380 = vmul.f32 %v1377, %v1379
        %v1381 = vadd.f32 %v1377, %v1380
        %vm1382 = vweird.f32 %v1376
        %vm1383 = vweird.f32 %v1377
        %vm1384 = vmor %vm1382, %vm1383
        %v1385 = vsel %vm1384, %v1377, %v1381
        %v1386 = vand.u32 2147483647, %v1376
        %vm1387 = vcmp.eq.f32.partialorder %v1386, 8.507059e+37
        %v1388 = vand.u32 %v1376, 2147483648
        %v1389 = vor.u32 1.1754944e-38, %v1388
        %v1390 = vsel %vm1387, %v1389, %v1385
        %v1391 = vmul.f32 1.0, %v1390
        %v1392 = vtanh.pop %v1372
        %v1393 = vxor.u32 %v1372, 2147483648
        %v1394 = vmul.f32 %v1393, 1.442695
        %v1395 = vpow.pop %v1394
        %v1396 = vadd.f32 %v1395, 1.0
        %v1397 = vrcp.pop %v1396
        %v1398 = vmul.f32 %v1396, %v1397
        %v1399 = vsub.f32 1.0, %v1398
        %v1400 = vmul.f32 %v1397, %v1399
        %v1401 = vadd.f32 %v1397, %v1400
        %vm1402 = vweird.f32 %v1396
        %vm1403 = vweird.f32 %v1397
        %vm1404 = vmor %vm1402, %vm1403
        %v1405 = vsel %vm1404, %v1397, %v1401
        %v1406 = vand.u32 2147483647, %v1396
        %vm1407 = vcmp.eq.f32.partialorder %v1406, 8.507059e+37
        %v1408 = vand.u32 %v1396, 2147483648
        %v1409 = vor.u32 1.1754944e-38, %v1408
        %v1410 = vsel %vm1407, %v1409, %v1405
        %v1411 = vmul.f32 1.0, %v1410
        %v1412 = vmul.f32 %v1391, %v1315
        %v1413 = vmul.f32 %v1391, %v1392
        %1415 = vrot.lane.b32.xlu0 %v1413, 64
        %v1416 = vpop.permute.xlu0 %1415
        %v1418 = vadd.f32 %v1412, %v1416
        %v1419 = vtanh.pop %v1418
        %v1420 = vmul.f32 %v1411, %v1419
        %v1421 = vmul.f32 %v1420, %v1007
        %1423 = vrot.lane.b32.xlu0 %v1421, 64
        %v1424 = vpop.permute.xlu0 %1423
        %v1426 = vsel %vm911, %v1424, 0.0
        %1427 = vadd.xlane.f32.xlu0 %v1426
        %v1428 = vpop.xlane.xlu0 %1427
        %1430 = vrot.lane.b32.xlu0 %v1420, 64
        %v1431 = vpop.permute.xlu0 %1430
        %v1432 = vsel %vm911, %v1431, 0
        %1434 = vmatpush.msra.mxu0 0.0
        %1435 = vmatpush.msra.mxu0 0.0
        %1436 = vmatpush.msra.mxu0 0.0
        %1437 = vmatpush.msra.mxu0 0.0
        %1438 = vmatpush.msra.mxu0 0.0
        %1439 = vmatpush.msra.mxu0 0.0
        %1440 = vmatpush.msra.mxu0 0.0
        %1441 = vmatpush.msra.mxu0 0.0
        %1442 = vmatpush.msra.mxu0 %v855
        %1443 = vmatpush.msra.mxu0 %v853
        %1444 = vmatpush.msra.mxu0 %v851
        %1445 = vmatpush.msra.mxu0 %v849
        %1446 = vmatpush.msra.mxu0 %v847
        %1447 = vmatpush.msra.mxu0 %v845
        %1448 = vmatpush.msra.mxu0 %v843
        %1449 = vmatpush.msra.mxu0 %v841
        %1450 = vmatmul.f32.gmra.mxu0 %v1432
        %v1451 = vpop.f32.mrf.mxu0
        %v1452 = vadd.f32 0.0, %v1451
        %1453 = vdwg.mxu0
        %1454 = vmatpush.msra.mxu0 0.0
        %1455 = vmatpush.msra.mxu0 0.0
        %1456 = vmatpush.msra.mxu0 0.0
        %1457 = vmatpush.msra.mxu0 0.0
        %1458 = vmatpush.msra.mxu0 0.0
        %1459 = vmatpush.msra.mxu0 0.0
        %1460 = vmatpush.msra.mxu0 0.0
        %1461 = vmatpush.msra.mxu0 0.0
        %1462 = vmatpush.msra.mxu0 %v856
        %1463 = vmatpush.msra.mxu0 %v854
        %1464 = vmatpush.msra.mxu0 %v852
        %1465 = vmatpush.msra.mxu0 %v850
        %1466 = vmatpush.msra.mxu0 %v848
        %1467 = vmatpush.msra.mxu0 %v846
        %1468 = vmatpush.msra.mxu0 %v844
        %1469 = vmatpush.msra.mxu0 %v842
        %1470 = vmatmul.f32.gmra.mxu0 %v1432
        %v1471 = vpop.f32.mrf.mxu0
        %v1472 = vadd.f32 0.0, %v1471
        %1473 = vdwg.mxu0
        %v1474 = vadd.f32 %v889, %v1452
        %v1475 = vadd.f32 %v909, %v1472
        %v1476 = vxor.u32 %v1474, 2147483648
        %v1477 = vmul.f32 %v1476, 1.442695
        %v1478 = vpow.pop %v1477
        %v1479 = vadd.f32 %v1478, 1.0
        %v1480 = vrcp.pop %v1479
        %v1481 = vmul.f32 %v1479, %v1480
        %v1482 = vsub.f32 1.0, %v1481
        %v1483 = vmul.f32 %v1480, %v1482
        %v1484 = vadd.f32 %v1480, %v1483
        %vm1485 = vweird.f32 %v1479
        %vm1486 = vweird.f32 %v1480
        %vm1487 = vmor %vm1485, %vm1486
        %v1488 = vsel %vm1487, %v1480, %v1484
        %v1489 = vand.u32 2147483647, %v1479
        %vm1490 = vcmp.eq.f32.partialorder %v1489, 8.507059e+37
        %v1491 = vand.u32 %v1479, 2147483648
        %v1492 = vor.u32 1.1754944e-38, %v1491
        %v1493 = vsel %vm1490, %v1492, %v1488
        %v1494 = vmul.f32 1.0, %v1493
        %v1495 = vtanh.pop %v1475
        %v1496 = vxor.u32 %v1475, 2147483648
        %v1497 = vmul.f32 %v1496, 1.442695
        %v1498 = vpow.pop %v1497
        %v1499 = vadd.f32 %v1498, 1.0
        %v1500 = vrcp.pop %v1499
        %v1501 = vmul.f32 %v1499, %v1500
        %v1502 = vsub.f32 1.0, %v1501
        %v1503 = vmul.f32 %v1500, %v1502
        %v1504 = vadd.f32 %v1500, %v1503
        %vm1505 = vweird.f32 %v1499
        %vm1506 = vweird.f32 %v1500
        %vm1507 = vmor %vm1505, %vm1506
        %v1508 = vsel %vm1507, %v1500, %v1504
        %v1509 = vand.u32 2147483647, %v1499
        %vm1510 = vcmp.eq.f32.partialorder %v1509, 8.507059e+37
        %v1511 = vand.u32 %v1499, 2147483648
        %v1512 = vor.u32 1.1754944e-38, %v1511
        %v1513 = vsel %vm1510, %v1512, %v1508
        %v1514 = vmul.f32 1.0, %v1513
        %v1515 = vmul.f32 %v1494, %v1418
        %v1516 = vmul.f32 %v1494, %v1495
        %1518 = vrot.lane.b32.xlu0 %v1516, 64
        %v1519 = vpop.permute.xlu0 %1518
        %v1521 = vadd.f32 %v1515, %v1519
        %v1522 = vtanh.pop %v1521
        %v1523 = vmul.f32 %v1514, %v1522
        %v1524 = vmul.f32 %v1523, %v1007
        %1526 = vrot.lane.b32.xlu0 %v1524, 64
        %v1527 = vpop.permute.xlu0 %1526
        %v1529 = vsel %vm911, %v1527, 0.0
        %1530 = vadd.xlane.f32.xlu0 %v1529
        %v1531 = vpop.xlane.xlu0 %1530
        %1533 = vrot.lane.b32.xlu0 %v1523, 64
        %v1534 = vpop.permute.xlu0 %1533
        %v1535 = vsel %vm911, %v1534, 0
        %1537 = vmatpush.msra.mxu0 0.0
        %1538 = vmatpush.msra.mxu0 0.0
        %1539 = vmatpush.msra.mxu0 0.0
        %1540 = vmatpush.msra.mxu0 0.0
        %1541 = vmatpush.msra.mxu0 0.0
        %1542 = vmatpush.msra.mxu0 0.0
        %1543 = vmatpush.msra.mxu0 0.0
        %1544 = vmatpush.msra.mxu0 0.0
        %1545 = vmatpush.msra.mxu0 %v855
        %1546 = vmatpush.msra.mxu0 %v853
        %1547 = vmatpush.msra.mxu0 %v851
        %1548 = vmatpush.msra.mxu0 %v849
        %1549 = vmatpush.msra.mxu0 %v847
        %1550 = vmatpush.msra.mxu0 %v845
        %1551 = vmatpush.msra.mxu0 %v843
        %1552 = vmatpush.msra.mxu0 %v841
        %1553 = vmatmul.f32.gmra.mxu0 %v1535
        %v1554 = vpop.f32.mrf.mxu0
        %v1555 = vadd.f32 0.0, %v1554
        %1556 = vdwg.mxu0
        %1557 = vmatpush.msra.mxu0 0.0
        %1558 = vmatpush.msra.mxu0 0.0
        %1559 = vmatpush.msra.mxu0 0.0
        %1560 = vmatpush.msra.mxu0 0.0
        %1561 = vmatpush.msra.mxu0 0.0
        %1562 = vmatpush.msra.mxu0 0.0
        %1563 = vmatpush.msra.mxu0 0.0
        %1564 = vmatpush.msra.mxu0 0.0
        %1565 = vmatpush.msra.mxu0 %v856
        %1566 = vmatpush.msra.mxu0 %v854
        %1567 = vmatpush.msra.mxu0 %v852
        %1568 = vmatpush.msra.mxu0 %v850
        %1569 = vmatpush.msra.mxu0 %v848
        %1570 = vmatpush.msra.mxu0 %v846
        %1571 = vmatpush.msra.mxu0 %v844
        %1572 = vmatpush.msra.mxu0 %v842
        %1573 = vmatmul.f32.gmra.mxu0 %v1535
        %v1574 = vpop.f32.mrf.mxu0
        %v1575 = vadd.f32 0.0, %v1574
        %1576 = vdwg.mxu0
        %v1577 = vadd.f32 %v889, %v1555
        %v1578 = vadd.f32 %v909, %v1575
        %v1579 = vxor.u32 %v1577, 2147483648
        %v1580 = vmul.f32 %v1579, 1.442695
        %v1581 = vpow.pop %v1580
        %v1582 = vadd.f32 %v1581, 1.0
        %v1583 = vrcp.pop %v1582
        %v1584 = vmul.f32 %v1582, %v1583
        %v1585 = vsub.f32 1.0, %v1584
        %v1586 = vmul.f32 %v1583, %v1585
        %v1587 = vadd.f32 %v1583, %v1586
        %vm1588 = vweird.f32 %v1582
        %vm1589 = vweird.f32 %v1583
        %vm1590 = vmor %vm1588, %vm1589
        %v1591 = vsel %vm1590, %v1583, %v1587
        %v1592 = vand.u32 2147483647, %v1582
        %vm1593 = vcmp.eq.f32.partialorder %v1592, 8.507059e+37
        %v1594 = vand.u32 %v1582, 2147483648
        %v1595 = vor.u32 1.1754944e-38, %v1594
        %v1596 = vsel %vm1593, %v1595, %v1591
        %v1597 = vmul.f32 1.0, %v1596
        %v1598 = vtanh.pop %v1578
        %v1599 = vxor.u32 %v1578, 2147483648
        %v1600 = vmul.f32 %v1599, 1.442695
        %v1601 = vpow.pop %v1600
        %v1602 = vadd.f32 %v1601, 1.0
        %v1603 = vrcp.pop %v1602
        %v1604 = vmul.f32 %v1602, %v1603
        %v1605 = vsub.f32 1.0, %v1604
        %v1606 = vmul.f32 %v1603, %v1605
        %v1607 = vadd.f32 %v1603, %v1606
        %vm1608 = vweird.f32 %v1602
        %vm1609 = vweird.f32 %v1603
        %vm1610 = vmor %vm1608, %vm1609
        %v1611 = vsel %vm1610, %v1603, %v1607
        %v1612 = vand.u32 2147483647, %v1602
        %vm1613 = vcmp.eq.f32.partialorder %v1612, 8.507059e+37
        %v1614 = vand.u32 %v1602, 2147483648
        %v1615 = vor.u32 1.1754944e-38, %v1614
        %v1616 = vsel %vm1613, %v1615, %v1611
        %v1617 = vmul.f32 1.0, %v1616
        %v1618 = vmul.f32 %v1597, %v1521
        %v1619 = vmul.f32 %v1597, %v1598
        %1621 = vrot.lane.b32.xlu0 %v1619, 64
        %v1622 = vpop.permute.xlu0 %1621
        %v1624 = vadd.f32 %v1618, %v1622
        %v1625 = vtanh.pop %v1624
        %v1626 = vmul.f32 %v1617, %v1625
        %v1627 = vmul.f32 %v1626, %v1007
        %1629 = vrot.lane.b32.xlu0 %v1627, 64
        %v1630 = vpop.permute.xlu0 %1629
        %v1632 = vsel %vm911, %v1630, 0.0
        %1633 = vadd.xlane.f32.xlu0 %v1632
        %v1634 = vpop.xlane.xlu0 %1633
        %1636 = vrot.lane.b32.xlu0 %v1626, 64
        %v1637 = vpop.permute.xlu0 %1636
        %v1638 = vsel %vm911, %v1637, 0
        %1640 = vmatpush.msra.mxu0 0.0
        %1641 = vmatpush.msra.mxu0 0.0
        %1642 = vmatpush.msra.mxu0 0.0
        %1643 = vmatpush.msra.mxu0 0.0
        %1644 = vmatpush.msra.mxu0 0.0
        %1645 = vmatpush.msra.mxu0 0.0
        %1646 = vmatpush.msra.mxu0 0.0
        %1647 = vmatpush.msra.mxu0 0.0
        %1648 = vmatpush.msra.mxu0 %v855
        %1649 = vmatpush.msra.mxu0 %v853
        %1650 = vmatpush.msra.mxu0 %v851
        %1651 = vmatpush.msra.mxu0 %v849
        %1652 = vmatpush.msra.mxu0 %v847
        %1653 = vmatpush.msra.mxu0 %v845
        %1654 = vmatpush.msra.mxu0 %v843
        %1655 = vmatpush.msra.mxu0 %v841
        %1656 = vmatmul.f32.gmra.mxu0 %v1638
        %v1657 = vpop.f32.mrf.mxu0
        %v1658 = vadd.f32 0.0, %v1657
        %1659 = vdwg.mxu0
        %1660 = vmatpush.msra.mxu0 0.0
        %1661 = vmatpush.msra.mxu0 0.0
        %1662 = vmatpush.msra.mxu0 0.0
        %1663 = vmatpush.msra.mxu0 0.0
        %1664 = vmatpush.msra.mxu0 0.0
        %1665 = vmatpush.msra.mxu0 0.0
        %1666 = vmatpush.msra.mxu0 0.0
        %1667 = vmatpush.msra.mxu0 0.0
        %1668 = vmatpush.msra.mxu0 %v856
        %1669 = vmatpush.msra.mxu0 %v854
        %1670 = vmatpush.msra.mxu0 %v852
        %1671 = vmatpush.msra.mxu0 %v850
        %1672 = vmatpush.msra.mxu0 %v848
        %1673 = vmatpush.msra.mxu0 %v846
        %1674 = vmatpush.msra.mxu0 %v844
        %1675 = vmatpush.msra.mxu0 %v842
        %1676 = vmatmul.f32.gmra.mxu0 %v1638
        %v1677 = vpop.f32.mrf.mxu0
        %v1678 = vadd.f32 0.0, %v1677
        %1679 = vdwg.mxu0
        %v1680 = vadd.f32 %v889, %v1658
        %v1681 = vadd.f32 %v909, %v1678
        %v1682 = vxor.u32 %v1680, 2147483648
        %v1683 = vmul.f32 %v1682, 1.442695
        %v1684 = vpow.pop %v1683
        %v1685 = vadd.f32 %v1684, 1.0
        %v1686 = vrcp.pop %v1685
        %v1687 = vmul.f32 %v1685, %v1686
        %v1688 = vsub.f32 1.0, %v1687
        %v1689 = vmul.f32 %v1686, %v1688
        %v1690 = vadd.f32 %v1686, %v1689
        %vm1691 = vweird.f32 %v1685
        %vm1692 = vweird.f32 %v1686
        %vm1693 = vmor %vm1691, %vm1692
        %v1694 = vsel %vm1693, %v1686, %v1690
        %v1695 = vand.u32 2147483647, %v1685
        %vm1696 = vcmp.eq.f32.partialorder %v1695, 8.507059e+37
        %v1697 = vand.u32 %v1685, 2147483648
        %v1698 = vor.u32 1.1754944e-38, %v1697
        %v1699 = vsel %vm1696, %v1698, %v1694
        %v1700 = vmul.f32 1.0, %v1699
        %v1701 = vtanh.pop %v1681
        %v1702 = vxor.u32 %v1681, 2147483648
        %v1703 = vmul.f32 %v1702, 1.442695
        %v1704 = vpow.pop %v1703
        %v1705 = vadd.f32 %v1704, 1.0
        %v1706 = vrcp.pop %v1705
        %v1707 = vmul.f32 %v1705, %v1706
        %v1708 = vsub.f32 1.0, %v1707
        %v1709 = vmul.f32 %v1706, %v1708
        %v1710 = vadd.f32 %v1706, %v1709
        %vm1711 = vweird.f32 %v1705
        %vm1712 = vweird.f32 %v1706
        %vm1713 = vmor %vm1711, %vm1712
        %v1714 = vsel %vm1713, %v1706, %v1710
        %v1715 = vand.u32 2147483647, %v1705
        %vm1716 = vcmp.eq.f32.partialorder %v1715, 8.507059e+37
        %v1717 = vand.u32 %v1705, 2147483648
        %v1718 = vor.u32 1.1754944e-38, %v1717
        %v1719 = vsel %vm1716, %v1718, %v1714
        %v1720 = vmul.f32 1.0, %v1719
        %v1721 = vmul.f32 %v1700, %v1624
        %v1722 = vmul.f32 %v1700, %v1701
        %1724 = vrot.lane.b32.xlu0 %v1722, 64
        %v1725 = vpop.permute.xlu0 %1724
        %v1727 = vadd.f32 %v1721, %v1725
        %v1728 = vtanh.pop %v1727
        %v1729 = vmul.f32 %v1720, %v1728
        %v1730 = vmul.f32 %v1729, %v1007
        %1732 = vrot.lane.b32.xlu0 %v1730, 64
        %v1733 = vpop.permute.xlu0 %1732
        %v1735 = vsel %vm911, %v1733, 0.0
        %1736 = vadd.xlane.f32.xlu0 %v1735
        %v1737 = vpop.xlane.xlu0 %1736
        %vm1738 = vcmask 7168
        %v1739 = vsel %vm1738, %v1016, %v1119
        %vm1740 = vcmask 15360
        %v1741 = vsel %vm1740, %v1739, %v1222
        %vm1742 = vcmask 23552
        %v1743 = vsel %vm1742, %v1741, %v1325
        %vm1744 = vcmask 31744
        %v1745 = vsel %vm1744, %v1743, %v1428
        %vm1746 = vcmask 39936
        %v1747 = vsel %vm1746, %v1745, %v1531
        %vm1748 = vcmask 48128
        %v1749 = vsel %vm1748, %v1747, %v1634
        %vm1750 = vcmask 56320
        %v1751 = vsel %vm1750, %v1749, %v1737
        %1752 = vset.pattern.permute.xlu0 64
        %1753 = vperm.xlu0 %1752, %v1005
        %v1754 = vpop.permute.xlu0 %1753
        %v1756 = vadd.f32 %v1751, %v1754
        %1757 = vst.msk [vmem:[%s248] sm:$0xff] %vm264, %v1756
        %p1758 = scmp.lt.s32.totalorder %s15, 1
        %s1759 = scalar_select %p1758, %s15, 1
        %s1760 = smul.addr %s1759, 8
        %s1761 = scalar_lea.vmem %s3, %s1760
        // Predicated region
        $region75: #{tpu_custom_call.1} parent=65 // pred_check
          %p1762 = pneg %p101
        $region76: #{tpu_custom_call.1} parent=65 // pred_check_branch
          %1764 = sbr.rel (%p1762) target = $region78
        $region77: #{tpu_custom_call.1} parent=65 // pred_region
          _
        $region78: #{tpu_custom_call.1} parent=65 // pred_fallthru
          _
      $region66: #{tpu_custom_call.1} parent=5 // pred_fallthru
        _
      %p1765 = scmp.le.s32.totalorder 2, %s10
      // Predicated region
      $region79: #{tpu_custom_call.1} parent=5 // pred_check
        %p1766 = pneg %p1765
      $region80: #{tpu_custom_call.1} parent=5 // pred_check_branch
        %1768 = sbr.rel (%p1766) target = $region82
      $region81: #{tpu_custom_call.1} parent=5 // pred_region
        %s1769 = ssub.s32 %s10, 2
        // Predicated region
        $region83: #{tpu_custom_call.1} parent=81 // pred_check
          %p1770 = pneg %p107
        $region84: #{tpu_custom_call.1} parent=81 // pred_check_branch
          %1772 = sbr.rel (%p1770) target = $region86
        $region85: #{tpu_custom_call.1} parent=81 // pred_region
          %p1773 = scmp.lt.s32.totalorder %s16, 1
          %s1774 = scalar_select %p1773, %s16, 1
          %s1775 = smul.addr %s1774, 8
          %s1776 = scalar_lea.vmem %s3, %s1775
        $region86: #{tpu_custom_call.1} parent=81 // pred_fallthru
          _
      $region82: #{tpu_custom_call.1} parent=5 // pred_fallthru
        _
    $region6: #{tpu_custom_call.1} parent=1 // loop_footer
      %s14 = sadd.s32 1, %s10
    $region7: #{tpu_custom_call.1} parent=1 // loop_footer_branch
      %9 = sbr.rel target = $region3
    $region8: #{tpu_custom_call.1} parent=1 // loop_exit
      _
    %1777 = vsyncpa [#allocation4], 1
    %s1778 = scalar_lea.sflag [#allocation4], 1
    %1779 = vsyncpa %s1778, 1

</llo_original>
